<compile_context>
chip_gen: v5e
topology: v5e:2x2
jax: 0.10.0
libtpu: 0.0.40
codegen_flags: <defaults>
</compile_context>

<pallas_src>
import functools

import jax
import jax.numpy as jnp
from jax.experimental import pallas as pl
from jax.experimental.pallas import tpu as pltpu


def _round_up8(n):
    return -(-n // 8) * 8


def _head_layout(hidden_dim, output_dim, value_input_dim, value_hidden_dim):
    """Row offsets (8-aligned, so slices never cross sublane tiles) of the packed
    head-parameter slab, plus its total (rows, width)."""
    width = max(output_dim, value_hidden_dim, 1)
    offs, r = {}, 0
    for name, nrows in (("w_lin", hidden_dim), ("b_lin", 1),
                        ("w_v1", value_input_dim), ("b_v1", 1),
                        ("w_v2", value_hidden_dim), ("b_v2", 1)):
        offs[name] = r
        r += _round_up8(nrows)
    return offs, r, width


def _da_kernel(x_ref, xflat_ref, lstm_w_ref, misc_ref, head_ref,
               out_ref, val_ref, hs_ref, *,
               input_dim, hidden_dim, output_dim, value_hidden_dim, head_offs):
    H = hidden_dim
    seq_len = x_ref.shape[0]

    # ---- unpack parameter slabs (static slices, no runtime cost) ----
    w_ih = lstm_w_ref[0:input_dim, :]                  # (input_dim, 4H)  bf16
    w_hh = lstm_w_ref[input_dim:input_dim + H, :]      # (H, 4H)          bf16
    b = misc_ref[0:1, :]                               # (1, 4H) f32 == b_ih + b_hh
    h = misc_ref[1:2, 0:H]                             # (1, H)  f32
    c = misc_ref[2:3, 0:H]                             # (1, H)  f32

    # ---- hoisted input projection for all timesteps (off the serial chain) ----
    x_bf = x_ref[...].astype(jnp.bfloat16)
    xg = jnp.dot(x_bf, w_ih, preferred_element_type=jnp.float32) + b   # (seq, 4H) f32

    # ---- fully unrolled recurrence (PyTorch gate order: i, f, g, o) ----
    for t in range(seq_len):
        gates = xg[t:t + 1, :] + jnp.dot(h.astype(jnp.bfloat16), w_hh,
                                         preferred_element_type=jnp.float32)  # (1,4H) f32
        sg = jax.nn.sigmoid(gates)          # one full-width push; i/f/o slices used
        tg = jnp.tanh(gates)                # one full-width push; g slice used
        i_g = sg[:, 0:H]
        f_g = sg[:, H:2 * H]
        g_g = tg[:, 2 * H:3 * H]
        o_g = sg[:, 3 * H:4 * H]
        c = f_g * c + i_g * g_g
        h = o_g * jnp.tanh(c)
        hs_ref[t:t + 1, :] = h

    # ---- policy head: per-timestep linear + softmax, one batched matmul ----
    ro = head_offs
    w_lin = head_ref[ro["w_lin"]:ro["w_lin"] + H, 0:output_dim]
    b_lin = head_ref[ro["b_lin"]:ro["b_lin"] + 1, 0:output_dim]
    hs = hs_ref[...]                                                     # (seq, H)
    logits = jnp.dot(hs, w_lin, preferred_element_type=jnp.float32) + b_lin
    m = jnp.max(logits, axis=-1, keepdims=True)
    e = jnp.exp(logits - m)
    inv = pl.reciprocal(jnp.sum(e, axis=-1, keepdims=True), approx=True)
    out_ref[...] = e * inv

    # ---- value head: linear -> relu -> linear (f32, off the critical path) ----
    vin = xflat_ref.shape[1]
    w_v1 = head_ref[ro["w_v1"]:ro["w_v1"] + vin, 0:value_hidden_dim]
    b_v1 = head_ref[ro["b_v1"]:ro["b_v1"] + 1, 0:value_hidden_dim]
    w_v2 = head_ref[ro["w_v2"]:ro["w_v2"] + value_hidden_dim, 0:1]
    b_v2 = head_ref[ro["b_v2"]:ro["b_v2"] + 1, 0:1]
    vh = jnp.maximum(
        jnp.dot(xflat_ref[...], w_v1, preferred_element_type=jnp.float32) + b_v1, 0.0)
    val_ref[...] = jnp.dot(vh, w_v2, preferred_element_type=jnp.float32) + b_v2


def pack_params(params, *, input_dim, hidden_dim, output_dim,
                value_input_dim, value_hidden_dim):
    """Pack the 13 parameter arrays into 3 DMA-friendly slabs (call once, outside jit)."""
    lstm_w = jnp.concatenate([params["w_ih"], params["w_hh"]],
                             axis=0).astype(jnp.bfloat16)              # (in+H, 4H) bf16

    misc = jnp.zeros((3, 4 * hidden_dim), jnp.float32)
    misc = misc.at[0, :].set(params["b_lstm"][0])
    misc = misc.at[1, :hidden_dim].set(params["h0"][0])
    misc = misc.at[2, :hidden_dim].set(params["c0"][0])

    offs, rows, width = _head_layout(hidden_dim, output_dim,
                                     value_input_dim, value_hidden_dim)
    head = jnp.zeros((rows, width), jnp.float32)
    head = head.at[offs["w_lin"]:offs["w_lin"] + hidden_dim, :output_dim].set(params["w_lin"])
    head = head.at[offs["b_lin"]:offs["b_lin"] + 1, :output_dim].set(params["b_lin"])
    head = head.at[offs["w_v1"]:offs["w_v1"] + value_input_dim, :value_hidden_dim].set(params["w_v1"])
    head = head.at[offs["b_v1"]:offs["b_v1"] + 1, :value_hidden_dim].set(params["b_v1"])
    head = head.at[offs["w_v2"]:offs["w_v2"] + value_hidden_dim, :1].set(params["w_v2"])
    head = head.at[offs["b_v2"]:offs["b_v2"] + 1, :1].set(params["b_v2"])
    return {"lstm_w": lstm_w, "misc": misc, "head": head}


def da_value_network_batched(input_vectors, packed, *, seq_len, input_dim, hidden_dim,
                             output_dim, value_input_dim, value_hidden_dim):
    """Forward pass over a batch of independent sequences.

    Returns (outputs[B, seq_len, output_dim], value[B, 1])."""
    assert value_input_dim == seq_len * input_dim
    x = input_vectors.reshape(-1, seq_len, input_dim).astype(jnp.float32)
    B = x.shape[0]
    x_flat = x.reshape(B, 1, value_input_dim)

    offs, head_rows, head_width = _head_layout(hidden_dim, output_dim,
                                               value_input_dim, value_hidden_dim)
    kernel = functools.partial(
        _da_kernel, input_dim=input_dim, hidden_dim=hidden_dim,
        output_dim=output_dim, value_hidden_dim=value_hidden_dim, head_offs=offs)

    outputs, value = pl.pallas_call(
        kernel,
        out_shape=(jax.ShapeDtypeStruct((B, seq_len, output_dim), jnp.float32),
                   jax.ShapeDtypeStruct((B, 1, 1), jnp.float32)),
        grid=(B,),
        in_specs=[
            pl.BlockSpec((None, seq_len, input_dim), lambda b: (b, 0, 0)),
            pl.BlockSpec((None, 1, value_input_dim), lambda b: (b, 0, 0)),
            # Shared parameter slabs: same block index for every b -> DMA'd once.
            pl.BlockSpec((input_dim + hidden_dim, 4 * hidden_dim), lambda b: (0, 0)),
            pl.BlockSpec((3, 4 * hidden_dim), lambda b: (0, 0)),
            pl.BlockSpec((head_rows, head_width), lambda b: (0, 0)),
        ],
        out_specs=(
            pl.BlockSpec((None, seq_len, output_dim), lambda b: (b, 0, 0)),
            pl.BlockSpec((None, 1, 1), lambda b: (b, 0, 0)),
        ),
        scratch_shapes=[pltpu.VMEM((seq_len, hidden_dim), jnp.float32)],
        compiler_params=pltpu.CompilerParams(dimension_semantics=("parallel",)),
    )(x, x_flat, packed["lstm_w"], packed["misc"], packed["head"])
    return outputs, value.reshape(B, 1)


def da_value_network(input_vectors, packed, *, seq_len, input_dim, hidden_dim,
                     output_dim, value_input_dim, value_hidden_dim):
    """Single-sequence forward matching the PyTorch module: returns
    (outputs[seq_len, output_dim], value[1])."""
    o, v = da_value_network_batched(
        input_vectors.reshape(1, seq_len, input_dim), packed,
        seq_len=seq_len, input_dim=input_dim, hidden_dim=hidden_dim,
        output_dim=output_dim, value_input_dim=value_input_dim,
        value_hidden_dim=value_hidden_dim)
    return o[0], v[0]


def init_params(key, input_dim, hidden_dim, output_dim, value_input_dim,
                value_hidden_dim):
    """Deterministic synthetic parameter init (uniform, PyTorch-like scale).

    Weights are stored transposed relative to torch.nn so the kernel does x @ W.
    The per-forward torch.randn hidden init is replaced by deterministic h0/c0."""
    ks = jax.random.split(key, 12)
    s_lstm = 1.0 / jnp.sqrt(hidden_dim)

    def u(k, shape, s):
        return jax.random.uniform(k, shape, jnp.float32, -s, s)

    b_ih = u(ks[2], (1, 4 * hidden_dim), s_lstm)
    b_hh = u(ks[3], (1, 4 * hidden_dim), s_lstm)
    return {
        # LSTM (PyTorch gate order i, f, g, o along the 4H axis)
        "w_ih": u(ks[0], (input_dim, 4 * hidden_dim), s_lstm),
        "w_hh": u(ks[1], (hidden_dim, 4 * hidden_dim), s_lstm),
        "b_lstm": b_ih + b_hh,
        "h0": jax.random.normal(ks[4], (1, hidden_dim), jnp.float32),
        "c0": jax.random.normal(ks[5], (1, hidden_dim), jnp.float32),
        # policy linear
        "w_lin": u(ks[6], (hidden_dim, output_dim), 1.0 / jnp.sqrt(hidden_dim)),
        "b_lin": u(ks[7], (1, output_dim), 1.0 / jnp.sqrt(hidden_dim)),
        # value MLP
        "w_v1": u(ks[8], (value_input_dim, value_hidden_dim),
                  1.0 / jnp.sqrt(value_input_dim)),
        "b_v1": u(ks[9], (1, value_hidden_dim), 1.0 / jnp.sqrt(value_input_dim)),
        "w_v2": u(ks[10], (value_hidden_dim, 1), 1.0 / jnp.sqrt(value_hidden_dim)),
        "b_v2": u(ks[11], (1, 1), 1.0 / jnp.sqrt(value_hidden_dim)),
    }


def _reference_forward(x, params, *, seq_len, hidden_dim):
    """Pure-JAX f32 reference of the module forward (for tolerance checks)."""
    H = hidden_dim
    h, c = params["h0"], params["c0"]
    hs = []
    for t in range(seq_len):
        gates = x[t:t + 1] @ params["w_ih"] + h @ params["w_hh"] + params["b_lstm"]
        i = jax.nn.sigmoid(gates[:, 0:H])
        f = jax.nn.sigmoid(gates[:, H:2 * H])
        g = jnp.tanh(gates[:, 2 * H:3 * H])
        o = jax.nn.sigmoid(gates[:, 3 * H:4 * H])
        c = f * c + i * g
        h = o * jnp.tanh(c)
        hs.append(h)
    hs = jnp.concatenate(hs, axis=0)
    outputs = jax.nn.softmax(hs @ params["w_lin"] + params["b_lin"], axis=-1)
    xf = x.reshape(1, -1)
    vh = jax.nn.relu(xf @ params["w_v1"] + params["b_v1"])
    value = vh @ params["w_v2"] + params["b_v2"]
    return outputs, value.reshape(1)


if __name__ == "__main__":
    seq_len, input_dim, hidden_dim, output_dim = 8, 16, 32, 8
    value_input_dim = seq_len * input_dim      # input_vectors must view to both shapes
    value_hidden_dim = 32
    batch = 2

    dims = dict(seq_len=seq_len, input_dim=input_dim, hidden_dim=hidden_dim,
                output_dim=output_dim, value_input_dim=value_input_dim,
                value_hidden_dim=value_hidden_dim)

    key = jax.random.PRNGKey(0)
    k_x, k_p = jax.random.split(key)
    x_batch = jax.random.normal(k_x, (batch, seq_len, input_dim), jnp.float32)
    params = init_params(k_p, input_dim, hidden_dim, output_dim,
                         value_input_dim, value_hidden_dim)
    packed = pack_params(params, **{k: dims[k] for k in
                                    ("input_dim", "hidden_dim", "output_dim",
                                     "value_input_dim", "value_hidden_dim")})

    fwd = jax.jit(functools.partial(da_value_network_batched, **dims))
    outputs, values = fwd(x_batch, packed)
    jax.block_until_ready((outputs, values))

    assert outputs.shape == (batch, seq_len, output_dim)
    assert values.shape == (batch, 1)
    # softmax rows sum to ~1 (approx reciprocal -> loose tolerance)
    assert bool(jnp.all(jnp.abs(jnp.sum(outputs, axis=-1) - 1.0) < 1e-2))

    # Tolerance check against a pure-JAX f32 reference (bf16 LSTM dots diverge slightly).
    for i in range(batch):
        ref_o, ref_v = _reference_forward(x_batch[i], params,
                                          seq_len=seq_len, hidden_dim=hidden_dim)
        assert bool(jnp.max(jnp.abs(outputs[i] - ref_o)) < 5e-2)
        assert bool(jnp.max(jnp.abs(values[i] - ref_v)) < 1e-3)

    # Module-parity single-sequence path (batch of 1).
    o1, v1 = da_value_network(x_batch[0], packed, **dims)
    jax.block_until_ready((o1, v1))
    assert o1.shape == (seq_len, output_dim) and v1.shape == (1,)

    print("KERNEL_OK")
</pallas_src>

<mosaic_0001>
module attributes {stable_mosaic.version = 11 : i64} {
  func.func @_da_kernel(%arg0: i32, %arg1: memref<1x8x16xf32, #tpu.memory_space<vmem>>, %arg2: memref<1x1x128xf32, #tpu.memory_space<vmem>>, %arg3: memref<48x128xbf16, #tpu.memory_space<vmem>>, %arg4: memref<3x128xf32, #tpu.memory_space<vmem>>, %arg5: memref<216x32xf32, #tpu.memory_space<vmem>>, %arg6: memref<1x8x8xf32, #tpu.memory_space<vmem>>, %arg7: memref<1x1x1xf32, #tpu.memory_space<vmem>>, %arg8: memref<8x32xf32, #tpu.memory_space<vmem>>) attributes {dimension_semantics = [#tpu.dimension_semantics<parallel>], iteration_bounds = array<i64: 2>, scalar_prefetch = 0 : i64, scratch_operands = 1 : i64, tpu.core_type = #tpu.core_type<tc>, window_params = [{transform_indices = @transform_0, window_bounds = array<i64: 1, 8, 16>}, {transform_indices = @transform_1, window_bounds = array<i64: 1, 1, 128>}, {pipeline_mode = #tpu.pipeline_mode<synchronous>, transform_indices = @transform_2, window_bounds = array<i64: 48, 128>}, {pipeline_mode = #tpu.pipeline_mode<synchronous>, transform_indices = @transform_3, window_bounds = array<i64: 3, 128>}, {pipeline_mode = #tpu.pipeline_mode<synchronous>, transform_indices = @transform_4, window_bounds = array<i64: 216, 32>}, {transform_indices = @transform_5, window_bounds = array<i64: 1, 8, 8>}, {transform_indices = @transform_6, window_bounds = array<i64: 1, 1, 1>}]} {
    %c0 = arith.constant 0 : index
    %c0_0 = arith.constant 0 : index
    %0 = vector.load %arg3[%c0, %c0_0] : memref<48x128xbf16, #tpu.memory_space<vmem>>, vector<16x128xbf16>
    %c16 = arith.constant 16 : index
    %c0_1 = arith.constant 0 : index
    %1 = vector.load %arg3[%c16, %c0_1] : memref<48x128xbf16, #tpu.memory_space<vmem>>, vector<32x128xbf16>
    %c0_2 = arith.constant 0 : index
    %c0_3 = arith.constant 0 : index
    %2 = vector.load %arg4[%c0_2, %c0_3] : memref<3x128xf32, #tpu.memory_space<vmem>>, vector<1x128xf32>
    %c1 = arith.constant 1 : index
    %c0_4 = arith.constant 0 : index
    %3 = vector.load %arg4[%c1, %c0_4] : memref<3x128xf32, #tpu.memory_space<vmem>>, vector<1x32xf32>
    %c2 = arith.constant 2 : index
    %c0_5 = arith.constant 0 : index
    %4 = vector.load %arg4[%c2, %c0_5] : memref<3x128xf32, #tpu.memory_space<vmem>>, vector<1x32xf32>
    %c0_6 = arith.constant 0 : index
    %c0_7 = arith.constant 0 : index
    %c0_8 = arith.constant 0 : index
    %5 = vector.load %arg1[%c0_6, %c0_7, %c0_8] : memref<1x8x16xf32, #tpu.memory_space<vmem>>, vector<1x8x16xf32>
    %6 = vector.shape_cast %5 : vector<1x8x16xf32> to vector<8x16xf32>
    %7 = arith.truncf %6 : vector<8x16xf32> to vector<8x16xbf16>
    %cst = arith.constant dense<0.000000e+00> : vector<8x128xf32>
    %8 = tpu.matmul %7, %0, %cst {dimension_numbers = #tpu.dot_dimension_numbers<[1], [0], [0], [1], [0, 0, 1, 1], [], []>} : vector<8x16xbf16>, vector<16x128xbf16>, vector<8x128xf32> -> vector<8x128xf32>
    %9 = vector.broadcast %2 : vector<1x128xf32> to vector<8x128xf32>
    %10 = arith.addf %8, %9 : vector<8x128xf32>
    %11 = vector.extract_strided_slice %10 {offsets = [0, 0], sizes = [1, 128], strides = [1, 1]} : vector<8x128xf32> to vector<1x128xf32>
    %12 = arith.truncf %3 : vector<1x32xf32> to vector<1x32xbf16>
    %cst_9 = arith.constant dense<0.000000e+00> : vector<1x128xf32>
    %13 = tpu.matmul %12, %1, %cst_9 {dimension_numbers = #tpu.dot_dimension_numbers<[1], [0], [0], [1], [0, 0, 1, 1], [], []>} : vector<1x32xbf16>, vector<32x128xbf16>, vector<1x128xf32> -> vector<1x128xf32>
    %14 = arith.addf %11, %13 : vector<1x128xf32>
    %15 = arith.negf %14 : vector<1x128xf32>
    %16 = math.exp %15 : vector<1x128xf32>
    %cst_10 = arith.constant 1.000000e+00 : f32
    %17 = vector.broadcast %cst_10 : f32 to vector<1x128xf32>
    %18 = arith.addf %17, %16 : vector<1x128xf32>
    %19 = arith.divf %17, %18 : vector<1x128xf32>
    %20 = math.tanh %14 : vector<1x128xf32>
    %21 = vector.extract_strided_slice %19 {offsets = [0, 0], sizes = [1, 32], strides = [1, 1]} : vector<1x128xf32> to vector<1x32xf32>
    %22 = vector.extract_strided_slice %19 {offsets = [0, 32], sizes = [1, 32], strides = [1, 1]} : vector<1x128xf32> to vector<1x32xf32>
    %23 = vector.extract_strided_slice %20 {offsets = [0, 64], sizes = [1, 32], strides = [1, 1]} : vector<1x128xf32> to vector<1x32xf32>
    %24 = vector.extract_strided_slice %19 {offsets = [0, 96], sizes = [1, 32], strides = [1, 1]} : vector<1x128xf32> to vector<1x32xf32>
    %25 = arith.mulf %22, %4 : vector<1x32xf32>
    %26 = arith.mulf %21, %23 : vector<1x32xf32>
    %27 = arith.addf %25, %26 : vector<1x32xf32>
    %28 = math.tanh %27 : vector<1x32xf32>
    %29 = arith.mulf %24, %28 : vector<1x32xf32>
    %c0_11 = arith.constant 0 : index
    %c0_12 = arith.constant 0 : index
    %30 = vector.load %arg8[%c0_11, %c0_12] : memref<8x32xf32, #tpu.memory_space<vmem>>, vector<1x32xf32>
    tpu.vector_store %arg8[%c0_11, %c0_12], %29 {strides = array<i32>} : memref<8x32xf32, #tpu.memory_space<vmem>>, vector<1x32xf32>,
    %31 = vector.extract_strided_slice %10 {offsets = [1, 0], sizes = [1, 128], strides = [1, 1]} : vector<8x128xf32> to vector<1x128xf32>
    %32 = arith.truncf %29 : vector<1x32xf32> to vector<1x32xbf16>
    %cst_13 = arith.constant dense<0.000000e+00> : vector<1x128xf32>
    %33 = tpu.matmul %32, %1, %cst_13 {dimension_numbers = #tpu.dot_dimension_numbers<[1], [0], [0], [1], [0, 0, 1, 1], [], []>} : vector<1x32xbf16>, vector<32x128xbf16>, vector<1x128xf32> -> vector<1x128xf32>
    %34 = arith.addf %31, %33 : vector<1x128xf32>
    %35 = arith.negf %34 : vector<1x128xf32>
    %36 = math.exp %35 : vector<1x128xf32>
    %cst_14 = arith.constant 1.000000e+00 : f32
    %37 = vector.broadcast %cst_14 : f32 to vector<1x128xf32>
    %38 = arith.addf %37, %36 : vector<1x128xf32>
    %39 = arith.divf %37, %38 : vector<1x128xf32>
    %40 = math.tanh %34 : vector<1x128xf32>
    %41 = vector.extract_strided_slice %39 {offsets = [0, 0], sizes = [1, 32], strides = [1, 1]} : vector<1x128xf32> to vector<1x32xf32>
    %42 = vector.extract_strided_slice %39 {offsets = [0, 32], sizes = [1, 32], strides = [1, 1]} : vector<1x128xf32> to vector<1x32xf32>
    %43 = vector.extract_strided_slice %40 {offsets = [0, 64], sizes = [1, 32], strides = [1, 1]} : vector<1x128xf32> to vector<1x32xf32>
    %44 = vector.extract_strided_slice %39 {offsets = [0, 96], sizes = [1, 32], strides = [1, 1]} : vector<1x128xf32> to vector<1x32xf32>
    %45 = arith.mulf %42, %27 : vector<1x32xf32>
    %46 = arith.mulf %41, %43 : vector<1x32xf32>
    %47 = arith.addf %45, %46 : vector<1x32xf32>
    %48 = math.tanh %47 : vector<1x32xf32>
    %49 = arith.mulf %44, %48 : vector<1x32xf32>
    %c1_15 = arith.constant 1 : index
    %c0_16 = arith.constant 0 : index
    %50 = vector.load %arg8[%c1_15, %c0_16] : memref<8x32xf32, #tpu.memory_space<vmem>>, vector<1x32xf32>
    tpu.vector_store %arg8[%c1_15, %c0_16], %49 {strides = array<i32>} : memref<8x32xf32, #tpu.memory_space<vmem>>, vector<1x32xf32>,
    %51 = vector.extract_strided_slice %10 {offsets = [2, 0], sizes = [1, 128], strides = [1, 1]} : vector<8x128xf32> to vector<1x128xf32>
    %52 = arith.truncf %49 : vector<1x32xf32> to vector<1x32xbf16>
    %cst_17 = arith.constant dense<0.000000e+00> : vector<1x128xf32>
    %53 = tpu.matmul %52, %1, %cst_17 {dimension_numbers = #tpu.dot_dimension_numbers<[1], [0], [0], [1], [0, 0, 1, 1], [], []>} : vector<1x32xbf16>, vector<32x128xbf16>, vector<1x128xf32> -> vector<1x128xf32>
    %54 = arith.addf %51, %53 : vector<1x128xf32>
    %55 = arith.negf %54 : vector<1x128xf32>
    %56 = math.exp %55 : vector<1x128xf32>
    %cst_18 = arith.constant 1.000000e+00 : f32
    %57 = vector.broadcast %cst_18 : f32 to vector<1x128xf32>
    %58 = arith.addf %57, %56 : vector<1x128xf32>
    %59 = arith.divf %57, %58 : vector<1x128xf32>
    %60 = math.tanh %54 : vector<1x128xf32>
    %61 = vector.extract_strided_slice %59 {offsets = [0, 0], sizes = [1, 32], strides = [1, 1]} : vector<1x128xf32> to vector<1x32xf32>
    %62 = vector.extract_strided_slice %59 {offsets = [0, 32], sizes = [1, 32], strides = [1, 1]} : vector<1x128xf32> to vector<1x32xf32>
    %63 = vector.extract_strided_slice %60 {offsets = [0, 64], sizes = [1, 32], strides = [1, 1]} : vector<1x128xf32> to vector<1x32xf32>
    %64 = vector.extract_strided_slice %59 {offsets = [0, 96], sizes = [1, 32], strides = [1, 1]} : vector<1x128xf32> to vector<1x32xf32>
    %65 = arith.mulf %62, %47 : vector<1x32xf32>
    %66 = arith.mulf %61, %63 : vector<1x32xf32>
    %67 = arith.addf %65, %66 : vector<1x32xf32>
    %68 = math.tanh %67 : vector<1x32xf32>
    %69 = arith.mulf %64, %68 : vector<1x32xf32>
    %c2_19 = arith.constant 2 : index
    %c0_20 = arith.constant 0 : index
    %70 = vector.load %arg8[%c2_19, %c0_20] : memref<8x32xf32, #tpu.memory_space<vmem>>, vector<1x32xf32>
    tpu.vector_store %arg8[%c2_19, %c0_20], %69 {strides = array<i32>} : memref<8x32xf32, #tpu.memory_space<vmem>>, vector<1x32xf32>,
    %71 = vector.extract_strided_slice %10 {offsets = [3, 0], sizes = [1, 128], strides = [1, 1]} : vector<8x128xf32> to vector<1x128xf32>
    %72 = arith.truncf %69 : vector<1x32xf32> to vector<1x32xbf16>
    %cst_21 = arith.constant dense<0.000000e+00> : vector<1x128xf32>
    %73 = tpu.matmul %72, %1, %cst_21 {dimension_numbers = #tpu.dot_dimension_numbers<[1], [0], [0], [1], [0, 0, 1, 1], [], []>} : vector<1x32xbf16>, vector<32x128xbf16>, vector<1x128xf32> -> vector<1x128xf32>
    %74 = arith.addf %71, %73 : vector<1x128xf32>
    %75 = arith.negf %74 : vector<1x128xf32>
    %76 = math.exp %75 : vector<1x128xf32>
    %cst_22 = arith.constant 1.000000e+00 : f32
    %77 = vector.broadcast %cst_22 : f32 to vector<1x128xf32>
    %78 = arith.addf %77, %76 : vector<1x128xf32>
    %79 = arith.divf %77, %78 : vector<1x128xf32>
    %80 = math.tanh %74 : vector<1x128xf32>
    %81 = vector.extract_strided_slice %79 {offsets = [0, 0], sizes = [1, 32], strides = [1, 1]} : vector<1x128xf32> to vector<1x32xf32>
    %82 = vector.extract_strided_slice %79 {offsets = [0, 32], sizes = [1, 32], strides = [1, 1]} : vector<1x128xf32> to vector<1x32xf32>
    %83 = vector.extract_strided_slice %80 {offsets = [0, 64], sizes = [1, 32], strides = [1, 1]} : vector<1x128xf32> to vector<1x32xf32>
    %84 = vector.extract_strided_slice %79 {offsets = [0, 96], sizes = [1, 32], strides = [1, 1]} : vector<1x128xf32> to vector<1x32xf32>
    %85 = arith.mulf %82, %67 : vector<1x32xf32>
    %86 = arith.mulf %81, %83 : vector<1x32xf32>
    %87 = arith.addf %85, %86 : vector<1x32xf32>
    %88 = math.tanh %87 : vector<1x32xf32>
    %89 = arith.mulf %84, %88 : vector<1x32xf32>
    %c3 = arith.constant 3 : index
    %c0_23 = arith.constant 0 : index
    %90 = vector.load %arg8[%c3, %c0_23] : memref<8x32xf32, #tpu.memory_space<vmem>>, vector<1x32xf32>
    tpu.vector_store %arg8[%c3, %c0_23], %89 {strides = array<i32>} : memref<8x32xf32, #tpu.memory_space<vmem>>, vector<1x32xf32>,
    %91 = vector.extract_strided_slice %10 {offsets = [4, 0], sizes = [1, 128], strides = [1, 1]} : vector<8x128xf32> to vector<1x128xf32>
    %92 = arith.truncf %89 : vector<1x32xf32> to vector<1x32xbf16>
    %cst_24 = arith.constant dense<0.000000e+00> : vector<1x128xf32>
    %93 = tpu.matmul %92, %1, %cst_24 {dimension_numbers = #tpu.dot_dimension_numbers<[1], [0], [0], [1], [0, 0, 1, 1], [], []>} : vector<1x32xbf16>, vector<32x128xbf16>, vector<1x128xf32> -> vector<1x128xf32>
    %94 = arith.addf %91, %93 : vector<1x128xf32>
    %95 = arith.negf %94 : vector<1x128xf32>
    %96 = math.exp %95 : vector<1x128xf32>
    %cst_25 = arith.constant 1.000000e+00 : f32
    %97 = vector.broadcast %cst_25 : f32 to vector<1x128xf32>
    %98 = arith.addf %97, %96 : vector<1x128xf32>
    %99 = arith.divf %97, %98 : vector<1x128xf32>
    %100 = math.tanh %94 : vector<1x128xf32>
    %101 = vector.extract_strided_slice %99 {offsets = [0, 0], sizes = [1, 32], strides = [1, 1]} : vector<1x128xf32> to vector<1x32xf32>
    %102 = vector.extract_strided_slice %99 {offsets = [0, 32], sizes = [1, 32], strides = [1, 1]} : vector<1x128xf32> to vector<1x32xf32>
    %103 = vector.extract_strided_slice %100 {offsets = [0, 64], sizes = [1, 32], strides = [1, 1]} : vector<1x128xf32> to vector<1x32xf32>
    %104 = vector.extract_strided_slice %99 {offsets = [0, 96], sizes = [1, 32], strides = [1, 1]} : vector<1x128xf32> to vector<1x32xf32>
    %105 = arith.mulf %102, %87 : vector<1x32xf32>
    %106 = arith.mulf %101, %103 : vector<1x32xf32>
    %107 = arith.addf %105, %106 : vector<1x32xf32>
    %108 = math.tanh %107 : vector<1x32xf32>
    %109 = arith.mulf %104, %108 : vector<1x32xf32>
    %c4 = arith.constant 4 : index
    %c0_26 = arith.constant 0 : index
    %110 = vector.load %arg8[%c4, %c0_26] : memref<8x32xf32, #tpu.memory_space<vmem>>, vector<1x32xf32>
    tpu.vector_store %arg8[%c4, %c0_26], %109 {strides = array<i32>} : memref<8x32xf32, #tpu.memory_space<vmem>>, vector<1x32xf32>,
    %111 = vector.extract_strided_slice %10 {offsets = [5, 0], sizes = [1, 128], strides = [1, 1]} : vector<8x128xf32> to vector<1x128xf32>
    %112 = arith.truncf %109 : vector<1x32xf32> to vector<1x32xbf16>
    %cst_27 = arith.constant dense<0.000000e+00> : vector<1x128xf32>
    %113 = tpu.matmul %112, %1, %cst_27 {dimension_numbers = #tpu.dot_dimension_numbers<[1], [0], [0], [1], [0, 0, 1, 1], [], []>} : vector<1x32xbf16>, vector<32x128xbf16>, vector<1x128xf32> -> vector<1x128xf32>
    %114 = arith.addf %111, %113 : vector<1x128xf32>
    %115 = arith.negf %114 : vector<1x128xf32>
    %116 = math.exp %115 : vector<1x128xf32>
    %cst_28 = arith.constant 1.000000e+00 : f32
    %117 = vector.broadcast %cst_28 : f32 to vector<1x128xf32>
    %118 = arith.addf %117, %116 : vector<1x128xf32>
    %119 = arith.divf %117, %118 : vector<1x128xf32>
    %120 = math.tanh %114 : vector<1x128xf32>
    %121 = vector.extract_strided_slice %119 {offsets = [0, 0], sizes = [1, 32], strides = [1, 1]} : vector<1x128xf32> to vector<1x32xf32>
    %122 = vector.extract_strided_slice %119 {offsets = [0, 32], sizes = [1, 32], strides = [1, 1]} : vector<1x128xf32> to vector<1x32xf32>
    %123 = vector.extract_strided_slice %120 {offsets = [0, 64], sizes = [1, 32], strides = [1, 1]} : vector<1x128xf32> to vector<1x32xf32>
    %124 = vector.extract_strided_slice %119 {offsets = [0, 96], sizes = [1, 32], strides = [1, 1]} : vector<1x128xf32> to vector<1x32xf32>
    %125 = arith.mulf %122, %107 : vector<1x32xf32>
    %126 = arith.mulf %121, %123 : vector<1x32xf32>
    %127 = arith.addf %125, %126 : vector<1x32xf32>
    %128 = math.tanh %127 : vector<1x32xf32>
    %129 = arith.mulf %124, %128 : vector<1x32xf32>
    %c5 = arith.constant 5 : index
    %c0_29 = arith.constant 0 : index
    %130 = vector.load %arg8[%c5, %c0_29] : memref<8x32xf32, #tpu.memory_space<vmem>>, vector<1x32xf32>
    tpu.vector_store %arg8[%c5, %c0_29], %129 {strides = array<i32>} : memref<8x32xf32, #tpu.memory_space<vmem>>, vector<1x32xf32>,
    %131 = vector.extract_strided_slice %10 {offsets = [6, 0], sizes = [1, 128], strides = [1, 1]} : vector<8x128xf32> to vector<1x128xf32>
    %132 = arith.truncf %129 : vector<1x32xf32> to vector<1x32xbf16>
    %cst_30 = arith.constant dense<0.000000e+00> : vector<1x128xf32>
    %133 = tpu.matmul %132, %1, %cst_30 {dimension_numbers = #tpu.dot_dimension_numbers<[1], [0], [0], [1], [0, 0, 1, 1], [], []>} : vector<1x32xbf16>, vector<32x128xbf16>, vector<1x128xf32> -> vector<1x128xf32>
    %134 = arith.addf %131, %133 : vector<1x128xf32>
    %135 = arith.negf %134 : vector<1x128xf32>
    %136 = math.exp %135 : vector<1x128xf32>
    %cst_31 = arith.constant 1.000000e+00 : f32
    %137 = vector.broadcast %cst_31 : f32 to vector<1x128xf32>
    %138 = arith.addf %137, %136 : vector<1x128xf32>
    %139 = arith.divf %137, %138 : vector<1x128xf32>
    %140 = math.tanh %134 : vector<1x128xf32>
    %141 = vector.extract_strided_slice %139 {offsets = [0, 0], sizes = [1, 32], strides = [1, 1]} : vector<1x128xf32> to vector<1x32xf32>
    %142 = vector.extract_strided_slice %139 {offsets = [0, 32], sizes = [1, 32], strides = [1, 1]} : vector<1x128xf32> to vector<1x32xf32>
    %143 = vector.extract_strided_slice %140 {offsets = [0, 64], sizes = [1, 32], strides = [1, 1]} : vector<1x128xf32> to vector<1x32xf32>
    %144 = vector.extract_strided_slice %139 {offsets = [0, 96], sizes = [1, 32], strides = [1, 1]} : vector<1x128xf32> to vector<1x32xf32>
    %145 = arith.mulf %142, %127 : vector<1x32xf32>
    %146 = arith.mulf %141, %143 : vector<1x32xf32>
    %147 = arith.addf %145, %146 : vector<1x32xf32>
    %148 = math.tanh %147 : vector<1x32xf32>
    %149 = arith.mulf %144, %148 : vector<1x32xf32>
    %c6 = arith.constant 6 : index
    %c0_32 = arith.constant 0 : index
    %150 = vector.load %arg8[%c6, %c0_32] : memref<8x32xf32, #tpu.memory_space<vmem>>, vector<1x32xf32>
    tpu.vector_store %arg8[%c6, %c0_32], %149 {strides = array<i32>} : memref<8x32xf32, #tpu.memory_space<vmem>>, vector<1x32xf32>,
    %151 = vector.extract_strided_slice %10 {offsets = [7, 0], sizes = [1, 128], strides = [1, 1]} : vector<8x128xf32> to vector<1x128xf32>
    %152 = arith.truncf %149 : vector<1x32xf32> to vector<1x32xbf16>
    %cst_33 = arith.constant dense<0.000000e+00> : vector<1x128xf32>
    %153 = tpu.matmul %152, %1, %cst_33 {dimension_numbers = #tpu.dot_dimension_numbers<[1], [0], [0], [1], [0, 0, 1, 1], [], []>} : vector<1x32xbf16>, vector<32x128xbf16>, vector<1x128xf32> -> vector<1x128xf32>
    %154 = arith.addf %151, %153 : vector<1x128xf32>
    %155 = arith.negf %154 : vector<1x128xf32>
    %156 = math.exp %155 : vector<1x128xf32>
    %cst_34 = arith.constant 1.000000e+00 : f32
    %157 = vector.broadcast %cst_34 : f32 to vector<1x128xf32>
    %158 = arith.addf %157, %156 : vector<1x128xf32>
    %159 = arith.divf %157, %158 : vector<1x128xf32>
    %160 = math.tanh %154 : vector<1x128xf32>
    %161 = vector.extract_strided_slice %159 {offsets = [0, 0], sizes = [1, 32], strides = [1, 1]} : vector<1x128xf32> to vector<1x32xf32>
    %162 = vector.extract_strided_slice %159 {offsets = [0, 32], sizes = [1, 32], strides = [1, 1]} : vector<1x128xf32> to vector<1x32xf32>
    %163 = vector.extract_strided_slice %160 {offsets = [0, 64], sizes = [1, 32], strides = [1, 1]} : vector<1x128xf32> to vector<1x32xf32>
    %164 = vector.extract_strided_slice %159 {offsets = [0, 96], sizes = [1, 32], strides = [1, 1]} : vector<1x128xf32> to vector<1x32xf32>
    %165 = arith.mulf %162, %147 : vector<1x32xf32>
    %166 = arith.mulf %161, %163 : vector<1x32xf32>
    %167 = arith.addf %165, %166 : vector<1x32xf32>
    %168 = math.tanh %167 : vector<1x32xf32>
    %169 = arith.mulf %164, %168 : vector<1x32xf32>
    %c7 = arith.constant 7 : index
    %c0_35 = arith.constant 0 : index
    %170 = vector.load %arg8[%c7, %c0_35] : memref<8x32xf32, #tpu.memory_space<vmem>>, vector<1x32xf32>
    tpu.vector_store %arg8[%c7, %c0_35], %169 {strides = array<i32>} : memref<8x32xf32, #tpu.memory_space<vmem>>, vector<1x32xf32>,
    %c0_36 = arith.constant 0 : index
    %c0_37 = arith.constant 0 : index
    %171 = vector.load %arg5[%c0_36, %c0_37] : memref<216x32xf32, #tpu.memory_space<vmem>>, vector<32x8xf32>
    %c32 = arith.constant 32 : index
    %c0_38 = arith.constant 0 : index
    %172 = vector.load %arg5[%c32, %c0_38] : memref<216x32xf32, #tpu.memory_space<vmem>>, vector<1x8xf32>
    %c0_39 = arith.constant 0 : index
    %c0_40 = arith.constant 0 : index
    %173 = vector.load %arg8[%c0_39, %c0_40] : memref<8x32xf32, #tpu.memory_space<vmem>>, vector<8x32xf32>
    %cst_41 = arith.constant dense<0.000000e+00> : vector<8x8xf32>
    %174 = tpu.matmul %173, %171, %cst_41 {dimension_numbers = #tpu.dot_dimension_numbers<[1], [0], [0], [1], [0, 0, 1, 1], [], []>} : vector<8x32xf32>, vector<32x8xf32>, vector<8x8xf32> -> vector<8x8xf32>
    %175 = vector.broadcast %172 : vector<1x8xf32> to vector<8x8xf32>
    %176 = arith.addf %174, %175 : vector<8x8xf32>
    %cst_42 = arith.constant dense<0xFF800000> : vector<8xf32>
    %177 = vector.multi_reduction <maximumf>, %176, %cst_42 [1] : vector<8x8xf32> to vector<8xf32>
    %178 = vector.shape_cast %177 : vector<8xf32> to vector<8x1xf32>
    %179 = vector.broadcast %178 : vector<8x1xf32> to vector<8x8xf32>
    %180 = arith.subf %176, %179 : vector<8x8xf32>
    %181 = math.exp %180 : vector<8x8xf32>
    %cst_43 = arith.constant dense<0.000000e+00> : vector<8xf32>
    %182 = vector.multi_reduction <add>, %181, %cst_43 [1] : vector<8x8xf32> to vector<8xf32>
    %183 = vector.shape_cast %182 : vector<8xf32> to vector<8x1xf32>
    %184 = tpu.reciprocal %183 {approx = true} : vector<8x1xf32> -> vector<8x1xf32>
    %185 = vector.broadcast %184 : vector<8x1xf32> to vector<8x8xf32>
    %186 = arith.mulf %181, %185 : vector<8x8xf32>
    %c0_44 = arith.constant 0 : index
    %c0_45 = arith.constant 0 : index
    %c0_46 = arith.constant 0 : index
    %187 = vector.load %arg6[%c0_44, %c0_45, %c0_46] : memref<1x8x8xf32, #tpu.memory_space<vmem>>, vector<1x8x8xf32>
    %188 = vector.shape_cast %187 : vector<1x8x8xf32> to vector<8x8xf32>
    %189 = vector.shape_cast %186 : vector<8x8xf32> to vector<1x8x8xf32>
    tpu.vector_store %arg6[%c0_44, %c0_45, %c0_46], %189 {strides = array<i32>} : memref<1x8x8xf32, #tpu.memory_space<vmem>>, vector<1x8x8xf32>,
    %c40 = arith.constant 40 : index
    %c0_47 = arith.constant 0 : index
    %190 = vector.load %arg5[%c40, %c0_47] : memref<216x32xf32, #tpu.memory_space<vmem>>, vector<128x32xf32>
    %c168 = arith.constant 168 : index
    %c0_48 = arith.constant 0 : index
    %191 = vector.load %arg5[%c168, %c0_48] : memref<216x32xf32, #tpu.memory_space<vmem>>, vector<1x32xf32>
    %c176 = arith.constant 176 : index
    %c0_49 = arith.constant 0 : index
    %192 = vector.load %arg5[%c176, %c0_49] : memref<216x32xf32, #tpu.memory_space<vmem>>, vector<32x1xf32>
    %c208 = arith.constant 208 : index
    %c0_50 = arith.constant 0 : index
    %193 = vector.load %arg5[%c208, %c0_50] : memref<216x32xf32, #tpu.memory_space<vmem>>, vector<1x1xf32>
    %c0_51 = arith.constant 0 : index
    %c0_52 = arith.constant 0 : index
    %c0_53 = arith.constant 0 : index
    %194 = vector.load %arg2[%c0_51, %c0_52, %c0_53] : memref<1x1x128xf32, #tpu.memory_space<vmem>>, vector<1x1x128xf32>
    %195 = vector.shape_cast %194 : vector<1x1x128xf32> to vector<1x128xf32>
    %cst_54 = arith.constant dense<0.000000e+00> : vector<1x32xf32>
    %196 = tpu.matmul %195, %190, %cst_54 {dimension_numbers = #tpu.dot_dimension_numbers<[1], [0], [0], [1], [0, 0, 1, 1], [], []>} : vector<1x128xf32>, vector<128x32xf32>, vector<1x32xf32> -> vector<1x32xf32>
    %197 = arith.addf %196, %191 : vector<1x32xf32>
    %cst_55 = arith.constant 0.000000e+00 : f32
    %198 = vector.broadcast %cst_55 : f32 to vector<1x32xf32>
    %199 = arith.maximumf %197, %198 : vector<1x32xf32>
    %cst_56 = arith.constant dense<0.000000e+00> : vector<1x1xf32>
    %200 = tpu.matmul %199, %192, %cst_56 {dimension_numbers = #tpu.dot_dimension_numbers<[1], [0], [0], [1], [0, 0, 1, 1], [], []>} : vector<1x32xf32>, vector<32x1xf32>, vector<1x1xf32> -> vector<1x1xf32>
    %201 = arith.addf %200, %193 : vector<1x1xf32>
    %c0_57 = arith.constant 0 : index
    %c0_58 = arith.constant 0 : index
    %c0_59 = arith.constant 0 : index
    %202 = vector.load %arg7[%c0_57, %c0_58, %c0_59] : memref<1x1x1xf32, #tpu.memory_space<vmem>>, vector<1x1x1xf32>
    %203 = vector.shape_cast %202 : vector<1x1x1xf32> to vector<1x1xf32>
    %204 = vector.shape_cast %201 : vector<1x1xf32> to vector<1x1x1xf32>
    tpu.vector_store %arg7[%c0_57, %c0_58, %c0_59], %204 {strides = array<i32>} : memref<1x1x1xf32, #tpu.memory_space<vmem>>, vector<1x1x1xf32>,
    return
  }
  func.func @transform_0(%arg0: i32) -> (i32, i32, i32) {
    %c0_i32 = arith.constant 0 : i32
    %c0_i32_0 = arith.constant 0 : i32
    %c0_i32_1 = arith.constant 0 : i32
    return %arg0, %c0_i32, %c0_i32_0 : i32, i32, i32
  }
  func.func @transform_1(%arg0: i32) -> (i32, i32, i32) {
    %c0_i32 = arith.constant 0 : i32
    %c0_i32_0 = arith.constant 0 : i32
    %c0_i32_1 = arith.constant 0 : i32
    return %arg0, %c0_i32, %c0_i32_0 : i32, i32, i32
  }
  func.func @transform_2(%arg0: i32) -> (i32, i32) {
    %c0_i32 = arith.constant 0 : i32
    %c0_i32_0 = arith.constant 0 : i32
    %c0_i32_1 = arith.constant 0 : i32
    return %c0_i32, %c0_i32_0 : i32, i32
  }
  func.func @transform_3(%arg0: i32) -> (i32, i32) {
    %c0_i32 = arith.constant 0 : i32
    %c0_i32_0 = arith.constant 0 : i32
    %c0_i32_1 = arith.constant 0 : i32
    return %c0_i32, %c0_i32_0 : i32, i32
  }
  func.func @transform_4(%arg0: i32) -> (i32, i32) {
    %c0_i32 = arith.constant 0 : i32
    %c0_i32_0 = arith.constant 0 : i32
    %c0_i32_1 = arith.constant 0 : i32
    return %c0_i32, %c0_i32_0 : i32, i32
  }
  func.func @transform_5(%arg0: i32) -> (i32, i32, i32) {
    %c0_i32 = arith.constant 0 : i32
    %c0_i32_0 = arith.constant 0 : i32
    %c0_i32_1 = arith.constant 0 : i32
    return %arg0, %c0_i32, %c0_i32_0 : i32, i32, i32
  }
  func.func @transform_6(%arg0: i32) -> (i32, i32, i32) {
    %c0_i32 = arith.constant 0 : i32
    %c0_i32_0 = arith.constant 0 : i32
    %c0_i32_1 = arith.constant 0 : i32
    return %arg0, %c0_i32, %c0_i32_0 : i32, i32, i32
  }
}

</mosaic_0001>

<llo_original>
// kernel: da_value_network_batched.1
$region0: #{da_value_network_batched.1}
  #allocation0 [shape = 'u32[]', space=smem, size = 0x4, offset = 0x4, fixed_abs, tag = 'smem constant byte address 0x4 - core index']
  #allocation1 [shape = 'u32[72,128]{1,0:T(1,128)}', space=vmem, size = 0x9000, scoped, tag = 'internal scratch']
  #allocation2 [shape = 'f32[8,32]{1,0:T(8,128)}', space=vmem, size = 0x1000, scoped, tag = 'scratch operand']
  %s0 = inlined_call_operand.vmem [shape: f32[2,8,16], index: 0, kind: input, shape index: {}]
  %s1 = inlined_call_operand.vmem [shape: f32[2,1,128], index: 1, kind: input, shape index: {}]
  %s2 = inlined_call_operand.vmem [shape: bf16[48,128], index: 2, kind: input, shape index: {}]
  %s3 = inlined_call_operand.vmem [shape: f32[3,128], index: 3, kind: input, shape index: {}]
  %s4 = inlined_call_operand.vmem [shape: f32[216,32], index: 4, kind: input, shape index: {}]
  %s5 = inlined_call_operand.hbm [shape: f32[2,8,8], index: 5, kind: output, shape index: {0}]
  %s6 = inlined_call_operand.vmem [shape: f32[2,1,1], index: 6, kind: output, shape index: {1}]
  %7 = xla_tuple %s5, %s6
  %s8 = sld [smem:[#allocation0]]
  $region61: #{da_value_network_batched.1} parent=0
    _
  %s10 = ssub.s32 1, %s8
  %s11 = scalar_select 0, %s10, %s8
  $region1: #{da_value_network_batched.1} parent=0
    #allocation3 [shape = 'u8[8192]{0}', space=vmem, size = 0x2000, scoped, tag = 'output window, operand 0']
    #allocation4 [shape = 's32[2]{0}', space=sflag, size = 0x8, scoped, tag = 'scoped memory for da_value_network_batched.1']
    %12 = vsyncpa [#allocation4], 0
    %s13 = scalar_lea.sflag [#allocation4], 1
    %14 = vsyncpa %s13, 0
    loop: start=0, step=1, limit=4
    $region2: #{da_value_network_batched.1} parent=1 // loop_pre_header
      _
    $region3: #{da_value_network_batched.1} parent=1 // loop_header
      %s16 = sphi 0, %s20
      %p17 = scmp.ge.s32.totalorder %s16, 4
      %s26 = sphi 0, %s28
      %s29 = sphi 0, %s26
      %s30 = sphi 0, %s29
      %s46 = sphi 0, %s30
      %s52 = sphi 0, %s54
      %s55 = sphi 0, %s52
      %s56 = sphi 0, %s55
      %s72 = sphi 0, %s56
      %s76 = sphi 0, %s76
      %s78 = sphi 0, %s76
      %s79 = sphi 0, %s78
      %s93 = sphi 0, %s79
      %s97 = sphi 0, %s97
      %s99 = sphi 0, %s97
      %s100 = sphi 0, %s99
      %s114 = sphi 0, %s100
      %s118 = sphi 0, %s118
      %s120 = sphi 0, %s118
      %s121 = sphi 0, %s120
      %s135 = sphi 0, %s121
      %s141 = sphi 0, %s143
      %s144 = sphi 0, %s141
      %s145 = sphi 0, %s144
      %s161 = sphi 0, %s145
      %s167 = sphi 0, %s169
      %s170 = sphi 0, %s167
      %s171 = sphi 0, %s170
      %s187 = sphi 0, %s171
    $region4: #{da_value_network_batched.1} parent=1 // loop_header_branch
      %19 = sbr.rel (%p17) target = $region8
    $region5: #{da_value_network_batched.1} parent=1 // loop_body
      %s21 = ssub.s32 %s16, 1
      %s22 = ssub.s32 %s16, 2
      %s23 = sadd.s32 %s16, 1
      %s24 = ssub.s32 %s16, %s23
      %p25 = scmp.eq.s32.totalorder %s24, 0
      %s27 = sadd.s32 %s26, 1
      %s28 = scalar_select %p25, %s26, %s27
      %p31 = pneg %p25
      %p32 = scmp.eq.s32.totalorder %s16, 1
      %p33 = por %p31, %p32
      %p34 = scmp.ne.s32.totalorder %s26, %s29
      %p35 = scmp.eq.s32.totalorder %s16, 0
      %p36 = por %p34, %p35
      %p37 = scmp.ne.s32.totalorder %s26, %s29
      %p38 = scmp.eq.s32.totalorder %s21, 1
      %p39 = por %p37, %p38
      %p40 = scmp.ne.s32.totalorder %s29, %s30
      %p41 = scmp.eq.s32.totalorder %s21, 0
      %p42 = por %p40, %p41
      %p43 = scmp.ne.s32.totalorder %s29, %s30
      %p44 = scmp.eq.s32.totalorder %s22, 1
      %p45 = por %p43, %p44
      %p47 = scmp.ne.s32.totalorder %s30, %s46
      %p48 = scmp.eq.s32.totalorder %s22, 0
      %p49 = por %p47, %p48
      %s50 = ssub.s32 %s16, %s23
      %p51 = scmp.eq.s32.totalorder %s50, 0
      %s53 = sadd.s32 %s52, 1
      %s54 = scalar_select %p51, %s52, %s53
      %p57 = pneg %p51
      %p58 = scmp.eq.s32.totalorder %s16, 1
      %p59 = por %p57, %p58
      %p60 = scmp.ne.s32.totalorder %s52, %s55
      %p61 = scmp.eq.s32.totalorder %s16, 0
      %p62 = por %p60, %p61
      %p63 = scmp.ne.s32.totalorder %s52, %s55
      %p64 = scmp.eq.s32.totalorder %s21, 1
      %p65 = por %p63, %p64
      %p66 = scmp.ne.s32.totalorder %s55, %s56
      %p67 = scmp.eq.s32.totalorder %s21, 0
      %p68 = por %p66, %p67
      %p69 = scmp.ne.s32.totalorder %s55, %s56
      %p70 = scmp.eq.s32.totalorder %s22, 1
      %p71 = por %p69, %p70
      %p73 = scmp.ne.s32.totalorder %s56, %s72
      %p74 = scmp.eq.s32.totalorder %s22, 0
      %p75 = por %p73, %p74
      %s77 = sadd.s32 %s76, 1
      %p80 = scmp.eq.s32.totalorder %s16, 1
      %p81 = scmp.ne.s32.totalorder %s76, %s78
      %p82 = scmp.eq.s32.totalorder %s16, 0
      %p83 = por %p81, %p82
      %p84 = scmp.ne.s32.totalorder %s76, %s78
      %p85 = scmp.eq.s32.totalorder %s21, 1
      %p86 = por %p84, %p85
      %p87 = scmp.ne.s32.totalorder %s78, %s79
      %p88 = scmp.eq.s32.totalorder %s21, 0
      %p89 = por %p87, %p88
      %p90 = scmp.ne.s32.totalorder %s78, %s79
      %p91 = scmp.eq.s32.totalorder %s22, 1
      %p92 = por %p90, %p91
      %p94 = scmp.ne.s32.totalorder %s79, %s93
      %p95 = scmp.eq.s32.totalorder %s22, 0
      %p96 = por %p94, %p95
      %s98 = sadd.s32 %s97, 1
      %p101 = scmp.eq.s32.totalorder %s16, 1
      %p102 = scmp.ne.s32.totalorder %s97, %s99
      %p103 = scmp.eq.s32.totalorder %s16, 0
      %p104 = por %p102, %p103
      %p105 = scmp.ne.s32.totalorder %s97, %s99
      %p106 = scmp.eq.s32.totalorder %s21, 1
      %p107 = por %p105, %p106
      %p108 = scmp.ne.s32.totalorder %s99, %s100
      %p109 = scmp.eq.s32.totalorder %s21, 0
      %p110 = por %p108, %p109
      %p111 = scmp.ne.s32.totalorder %s99, %s100
      %p112 = scmp.eq.s32.totalorder %s22, 1
      %p113 = por %p111, %p112
      %p115 = scmp.ne.s32.totalorder %s100, %s114
      %p116 = scmp.eq.s32.totalorder %s22, 0
      %p117 = por %p115, %p116
      %s119 = sadd.s32 %s118, 1
      %p122 = scmp.eq.s32.totalorder %s16, 1
      %p123 = scmp.ne.s32.totalorder %s118, %s120
      %p124 = scmp.eq.s32.totalorder %s16, 0
      %p125 = por %p123, %p124
      %p126 = scmp.ne.s32.totalorder %s118, %s120
      %p127 = scmp.eq.s32.totalorder %s21, 1
      %p128 = por %p126, %p127
      %p129 = scmp.ne.s32.totalorder %s120, %s121
      %p130 = scmp.eq.s32.totalorder %s21, 0
      %p131 = por %p129, %p130
      %p132 = scmp.ne.s32.totalorder %s120, %s121
      %p133 = scmp.eq.s32.totalorder %s22, 1
      %p134 = por %p132, %p133
      %p136 = scmp.ne.s32.totalorder %s121, %s135
      %p137 = scmp.eq.s32.totalorder %s22, 0
      %p138 = por %p136, %p137
      %s139 = ssub.s32 %s16, %s23
      %p140 = scmp.eq.s32.totalorder %s139, 0
      %s142 = sadd.s32 %s141, 1
      %s143 = scalar_select %p140, %s141, %s142
      %p146 = pneg %p140
      %p147 = scmp.eq.s32.totalorder %s16, 1
      %p148 = por %p146, %p147
      %p149 = scmp.ne.s32.totalorder %s141, %s144
      %p150 = scmp.eq.s32.totalorder %s16, 0
      %p151 = por %p149, %p150
      %p152 = scmp.ne.s32.totalorder %s141, %s144
      %p153 = scmp.eq.s32.totalorder %s21, 1
      %p154 = por %p152, %p153
      %p155 = scmp.ne.s32.totalorder %s144, %s145
      %p156 = scmp.eq.s32.totalorder %s21, 0
      %p157 = por %p155, %p156
      %p158 = scmp.ne.s32.totalorder %s144, %s145
      %p159 = scmp.eq.s32.totalorder %s22, 1
      %p160 = por %p158, %p159
      %p162 = scmp.ne.s32.totalorder %s145, %s161
      %p163 = scmp.eq.s32.totalorder %s22, 0
      %p164 = por %p162, %p163
      %s165 = ssub.s32 %s16, %s23
      %p166 = scmp.eq.s32.totalorder %s165, 0
      %s168 = sadd.s32 %s167, 1
      %s169 = scalar_select %p166, %s167, %s168
      %p172 = pneg %p166
      %p173 = scmp.eq.s32.totalorder %s16, 1
      %p174 = por %p172, %p173
      %p175 = scmp.ne.s32.totalorder %s167, %s170
      %p176 = scmp.eq.s32.totalorder %s16, 0
      %p177 = por %p175, %p176
      %p178 = scmp.ne.s32.totalorder %s167, %s170
      %p179 = scmp.eq.s32.totalorder %s21, 1
      %p180 = por %p178, %p179
      %p181 = scmp.ne.s32.totalorder %s170, %s171
      %p182 = scmp.eq.s32.totalorder %s21, 0
      %p183 = por %p181, %p182
      %p184 = scmp.ne.s32.totalorder %s170, %s171
      %p185 = scmp.eq.s32.totalorder %s22, 1
      %p186 = por %p184, %p185
      %p188 = scmp.ne.s32.totalorder %s171, %s187
      %p189 = scmp.eq.s32.totalorder %s22, 0
      %p190 = por %p188, %p189
      %p191 = scmp.le.s32.totalorder 1, %s16
      %p192 = scmp.lt.s32.totalorder %s16, 3
      %p193 = pnand %p191, %p192
      %p194 = pneg %p193
      // Predicated region
      $region9: #{da_value_network_batched.1} parent=5 // pred_check
        _
      $region10: #{da_value_network_batched.1} parent=5 // pred_check_branch
        %196 = sbr.rel (%p193) target = $region12
      $region11: #{da_value_network_batched.1} parent=5 // pred_region
        %s197 = ssub.s32 %s16, 1
        // Predicated region
        $region13: #{da_value_network_batched.1} parent=11 // pred_check
          %p198 = pneg %p89
        $region14: #{da_value_network_batched.1} parent=11 // pred_check_branch
          %200 = sbr.rel (%p198) target = $region16
        $region15: #{da_value_network_batched.1} parent=11 // pred_region
          _
        $region16: #{da_value_network_batched.1} parent=11 // pred_fallthru
          _
        // Predicated region
        $region17: #{da_value_network_batched.1} parent=11 // pred_check
          %p201 = pneg %p110
        $region18: #{da_value_network_batched.1} parent=11 // pred_check_branch
          %203 = sbr.rel (%p201) target = $region20
        $region19: #{da_value_network_batched.1} parent=11 // pred_region
          _
        $region20: #{da_value_network_batched.1} parent=11 // pred_fallthru
          _
        // Predicated region
        $region21: #{da_value_network_batched.1} parent=11 // pred_check
          %p204 = pneg %p131
        $region22: #{da_value_network_batched.1} parent=11 // pred_check_branch
          %206 = sbr.rel (%p204) target = $region24
        $region23: #{da_value_network_batched.1} parent=11 // pred_region
          _
        $region24: #{da_value_network_batched.1} parent=11 // pred_fallthru
          _
      $region12: #{da_value_network_batched.1} parent=5 // pred_fallthru
        _
      %p207 = scmp.lt.s32.totalorder %s16, 2
      // Predicated region
      $region25: #{da_value_network_batched.1} parent=5 // pred_check
        %p208 = pneg %p207
      $region26: #{da_value_network_batched.1} parent=5 // pred_check_branch
        %210 = sbr.rel (%p208) target = $region28
      $region27: #{da_value_network_batched.1} parent=5 // pred_region
        // Predicated region
        $region29: #{da_value_network_batched.1} parent=27 // pred_check
          %p211 = pneg %p36
        $region30: #{da_value_network_batched.1} parent=27 // pred_check_branch
          %213 = sbr.rel (%p211) target = $region32
        $region31: #{da_value_network_batched.1} parent=27 // pred_region
          %p214 = scmp.lt.s32.totalorder %s16, 1
          %s215 = scalar_select %p214, %s16, 1
          %s216 = smul.addr %s215, 8
          %s217 = scalar_lea.vmem %s0, %s216
        $region32: #{da_value_network_batched.1} parent=27 // pred_fallthru
          _
        // Predicated region
        $region33: #{da_value_network_batched.1} parent=27 // pred_check
          %p218 = pneg %p62
        $region34: #{da_value_network_batched.1} parent=27 // pred_check_branch
          %220 = sbr.rel (%p218) target = $region36
        $region35: #{da_value_network_batched.1} parent=27 // pred_region
          %p221 = scmp.lt.s32.totalorder %s16, 1
          %s222 = scalar_select %p221, %s16, 1
          %s223 = scalar_lea.vmem %s1, %s222
        $region36: #{da_value_network_batched.1} parent=27 // pred_fallthru
          _
      $region28: #{da_value_network_batched.1} parent=5 // pred_fallthru
        _
      %p224 = scmp.le.s32.totalorder 1, %s16
      %p225 = scmp.lt.s32.totalorder %s16, 3
      %p226 = pnand %p224, %p225
      %p227 = pneg %p226
      // Predicated region
      $region37: #{da_value_network_batched.1} parent=5 // pred_check
        _
      $region38: #{da_value_network_batched.1} parent=5 // pred_check_branch
        %229 = sbr.rel (%p226) target = $region40
      $region39: #{da_value_network_batched.1} parent=5 // pred_region
        %s230 = ssub.s32 %s16, 1
        %p231 = scmp.lt.s32.totalorder %s21, 1
        %s232 = scalar_select %p231, %s21, 1
        %s233 = smul.addr %s232, 8
        %s234 = scalar_lea.vmem %s0, %s233
        %p235 = pneg %p42
        %p236 = pneg %p39
        %p237 = scmp.lt.s32.totalorder %s21, 1
        %s238 = scalar_select %p237, %s21, 1
        %s239 = scalar_lea.vmem %s1, %s238
        %p240 = pneg %p68
        %p241 = pneg %p65
        %p242 = pneg %p89
        %p243 = pneg %p86
        %p244 = pneg %p110
        %p245 = pneg %p107
        %p246 = pneg %p131
        %p247 = pneg %p128
        %p248 = pneg %p157
        %p249 = pneg %p154
        %s250 = sand.u32 %s144, 1
        %s251 = scalar_lea.sflag [#allocation4], %s250
        %s252 = sand.u32 %s144, 1
        %s253 = smul.addr %s252, 8
        %s254 = scalar_lea.vmem [#allocation3], %s253
        %p255 = pneg %p183
        %p256 = pneg %p180
        %p257 = scmp.lt.s32.totalorder %s21, 1
        %s258 = scalar_select %p257, %s21, 1
        %s259 = scalar_lea.vmem %s6, %s258
        %p260 = scmp.lt.s32.totalorder %s21, 1
        %s261 = scalar_select %p260, %s21, 1
        %s262 = smul.addr %s261, 8
        %s263 = scalar_lea.vmem %s0, %s262
        %p264 = scmp.lt.s32.totalorder %s21, 1
        %s265 = scalar_select %p264, %s21, 1
        %s266 = scalar_lea.vmem %s1, %s265
        %p267 = scmp.lt.s32.totalorder %s21, 1
        %s268 = scalar_select %p267, %s21, 1
        %s269 = scalar_lea.vmem %s6, %s268
        %v271 = vld [vmem:[%s2] sm:$0xf]
        %v272 = vld [vmem:[%s2 + $0x4] sm:$0xf]
        %v273 = vld [vmem:[%s2 + $0x8] sm:$0xf]
        %v274 = vld [vmem:[%s2 + $0xc] sm:$0xf]
        %v275 = vld [vmem:[%s2 + $0x10] sm:$0xf]
        %v276 = vld [vmem:[%s2 + $0x14] sm:$0xf]
        %v277 = vld [vmem:[%s3] sm:$0x1]
        %v278 = vld [vmem:[%s3 + $0x1] sm:$0x1]
        %v279 = vld [vmem:[%s3 + $0x2] sm:$0x1]
        %v280 = vld [vmem:[%s263] sm:$0xff]
        %v281 = vpack.c.bf16 %v280, %v280
        %v282 = vperm.slane %v277, 0
        %v285 = vunpack.c.l.b16 %v271
        %v286 = vunpack.c.l.b16 %v272
        %v287 = vpack.c.b16 %v286, %v285
        %vm289 = vcmask 130048
        %v291 = vsel %vm289, %v281, 0
        %293 = vmatpush.bf16.msra.mxu0 0
        %294 = vmatpush.bf16.msra.mxu0 0
        %295 = vmatpush.bf16.msra.mxu0 0
        %296 = vmatpush.bf16.msra.mxu0 0
        %297 = vmatpush.bf16.msra.mxu0 0
        %298 = vmatpush.bf16.msra.mxu0 0
        %299 = vmatpush.bf16.msra.mxu0 0
        %300 = vmatpush.bf16.msra.mxu0 %v287
        %301 = vmatmul.bf16.gmra.mxu0 %v291
        %v302 = vpop.f32.mrf.mxu0
        %v303 = vadd.f32 %v282, %v302
        %v304 = vpop.f32.mrf.mxu0
        %305 = vdwg.mxu0
        %v306 = vpack.c.bf16 %v278, %v278
        %v311 = vunpack.c.l.b16 %v273
        %v312 = vunpack.c.l.b16 %v274
        %v313 = vunpack.c.l.b16 %v275
        %v314 = vunpack.c.l.b16 %v276
        %v315 = vpack.c.b16 %v312, %v311
        %v316 = vpack.c.b16 %v314, %v313
        %vm319 = vcmask 261120
        %v321 = vsel %vm319, %v306, 0
        %323 = vmatpush.bf16.msra.mxu0 0
        %324 = vmatpush.bf16.msra.mxu0 0
        %325 = vmatpush.bf16.msra.mxu0 0
        %326 = vmatpush.bf16.msra.mxu0 0
        %327 = vmatpush.bf16.msra.mxu0 0
        %328 = vmatpush.bf16.msra.mxu0 0
        %329 = vmatpush.bf16.msra.mxu0 %v316
        %330 = vmatpush.bf16.msra.mxu0 %v315
        %331 = vmatmul.bf16.gmra.mxu0 %v321
        %v332 = vpop.f32.mrf.mxu0
        %v333 = vadd.f32 0.0, %v332
        %v334 = vpop.f32.mrf.mxu0
        %335 = vdwg.mxu0
        %v336 = vadd.f32 %v303, %v333
        %v337 = vxor.u32 %v336, 2147483648
        %v338 = vmul.f32 %v337, 1.442695
        %v339 = vpow.pop %v338
        %v340 = vadd.f32 %v339, 1.0
        %v341 = vrcp.pop %v340
        %v342 = vmul.f32 %v340, %v341
        %v343 = vsub.f32 1.0, %v342
        %v344 = vmul.f32 %v341, %v343
        %v345 = vadd.f32 %v341, %v344
        %vm346 = vweird.f32 %v340
        %vm347 = vweird.f32 %v341
        %vm348 = vmor %vm346, %vm347
        %v349 = vsel %vm348, %v341, %v345
        %v350 = vand.u32 2147483647, %v340
        %vm351 = vcmp.eq.f32.partialorder %v350, 8.507059e+37
        %v352 = vand.u32 %v340, 2147483648
        %v353 = vor.u32 1.1754944e-38, %v352
        %v354 = vsel %vm351, %v353, %v349
        %v355 = vmul.f32 1.0, %v354
        %v356 = vtanh.pop %v336
        %358 = vrot.lane.b32.xlu0 %v279, 32
        %v359 = vpop.permute.xlu0 %358
        %v361 = vmul.f32 %v355, %v359
        %363 = vrot.lane.b32.xlu0 %v356, 64
        %v364 = vpop.permute.xlu0 %363
        %v366 = vmul.f32 %v355, %v364
        %368 = vrot.lane.b32.xlu0 %v366, 32
        %v369 = vpop.permute.xlu0 %368
        %v371 = vadd.f32 %v361, %v369
        %v372 = vtanh.pop %v371
        %374 = vrot.lane.b32.xlu0 %v372, 64
        %v375 = vpop.permute.xlu0 %374
        %v377 = vmul.f32 %v355, %v375
        %379 = vrot.lane.b32.xlu0 %v377, 32
        %v380 = vpop.permute.xlu0 %379
        %vm382 = vcmask 253952
        %383 = vst.msk [vmem:[#allocation2] sm:$0x1] %vm382, %v380
        %v384 = vpack.c.bf16 %v377, %v377
        %386 = vrot.lane.b32.xlu0 %v384, 32
        %v387 = vpop.permute.xlu0 %386
        %v389 = vsel %vm319, %v387, 0
        %391 = vmatpush.bf16.msra.mxu0 0
        %392 = vmatpush.bf16.msra.mxu0 0
        %393 = vmatpush.bf16.msra.mxu0 0
        %394 = vmatpush.bf16.msra.mxu0 0
        %395 = vmatpush.bf16.msra.mxu0 0
        %396 = vmatpush.bf16.msra.mxu0 0
        %397 = vmatpush.bf16.msra.mxu0 %v316
        %398 = vmatpush.bf16.msra.mxu0 %v315
        %399 = vmatmul.bf16.gmra.mxu0 %v389
        %v400 = vpop.f32.mrf.mxu0
        %v401 = vadd.f32 0.0, %v400
        %v402 = vpop.f32.mrf.mxu0
        %403 = vdwg.mxu0
        %v405 = vrot.slane %v401, 7
        %v407 = vadd.f32 %v303, %v405
        %v408 = vxor.u32 %v407, 2147483648
        %v409 = vmul.f32 %v408, 1.442695
        %v410 = vpow.pop %v409
        %v411 = vadd.f32 %v410, 1.0
        %v412 = vrcp.pop %v411
        %v413 = vmul.f32 %v411, %v412
        %v414 = vsub.f32 1.0, %v413
        %v415 = vmul.f32 %v412, %v414
        %v416 = vadd.f32 %v412, %v415
        %vm417 = vweird.f32 %v411
        %vm418 = vweird.f32 %v412
        %vm419 = vmor %vm417, %vm418
        %v420 = vsel %vm419, %v412, %v416
        %v421 = vand.u32 2147483647, %v411
        %vm422 = vcmp.eq.f32.partialorder %v421, 8.507059e+37
        %v423 = vand.u32 %v411, 2147483648
        %v424 = vor.u32 1.1754944e-38, %v423
        %v425 = vsel %vm422, %v424, %v420
        %v426 = vmul.f32 1.0, %v425
        %v427 = vtanh.pop %v407
        %v429 = vrot.slane %v371, 7
        %v431 = vmul.f32 %v426, %v429
        %433 = vrot.lane.b32.xlu0 %v427, 64
        %v434 = vpop.permute.xlu0 %433
        %v436 = vmul.f32 %v426, %v434
        %438 = vrot.lane.b32.xlu0 %v436, 32
        %v439 = vpop.permute.xlu0 %438
        %v441 = vadd.f32 %v431, %v439
        %v442 = vtanh.pop %v441
        %444 = vrot.lane.b32.xlu0 %v442, 64
        %v445 = vpop.permute.xlu0 %444
        %v447 = vmul.f32 %v426, %v445
        %449 = vrot.lane.b32.xlu0 %v447, 32
        %v450 = vpop.permute.xlu0 %449
        %vm452 = vcmask 254977
        %453 = vst.msk [vmem:[#allocation2] sm:$0x2] %vm452, %v450
        %v454 = vpack.c.bf16 %v447, %v447
        %v456 = vshrl.u32 %v454, 16
        %458 = vrot.lane.b32.xlu0 %v456, 32
        %v459 = vpop.permute.xlu0 %458
        %v461 = vsel %vm319, %v459, 0
        %463 = vmatpush.bf16.msra.mxu0 0
        %464 = vmatpush.bf16.msra.mxu0 0
        %465 = vmatpush.bf16.msra.mxu0 0
        %466 = vmatpush.bf16.msra.mxu0 0
        %467 = vmatpush.bf16.msra.mxu0 0
        %468 = vmatpush.bf16.msra.mxu0 0
        %469 = vmatpush.bf16.msra.mxu0 %v316
        %470 = vmatpush.bf16.msra.mxu0 %v315
        %471 = vmatmul.bf16.gmra.mxu0 %v461
        %v472 = vpop.f32.mrf.mxu0
        %v473 = vadd.f32 0.0, %v472
        %v474 = vpop.f32.mrf.mxu0
        %475 = vdwg.mxu0
        %v477 = vrot.slane %v473, 6
        %v479 = vadd.f32 %v303, %v477
        %v480 = vxor.u32 %v479, 2147483648
        %v481 = vmul.f32 %v480, 1.442695
        %v482 = vpow.pop %v481
        %v483 = vadd.f32 %v482, 1.0
        %v484 = vrcp.pop %v483
        %v485 = vmul.f32 %v483, %v484
        %v486 = vsub.f32 1.0, %v485
        %v487 = vmul.f32 %v484, %v486
        %v488 = vadd.f32 %v484, %v487
        %vm489 = vweird.f32 %v483
        %vm490 = vweird.f32 %v484
        %vm491 = vmor %vm489, %vm490
        %v492 = vsel %vm491, %v484, %v488
        %v493 = vand.u32 2147483647, %v483
        %vm494 = vcmp.eq.f32.partialorder %v493, 8.507059e+37
        %v495 = vand.u32 %v483, 2147483648
        %v496 = vor.u32 1.1754944e-38, %v495
        %v497 = vsel %vm494, %v496, %v492
        %v498 = vmul.f32 1.0, %v497
        %v499 = vtanh.pop %v479
        %v501 = vrot.slane %v441, 7
        %v503 = vmul.f32 %v498, %v501
        %505 = vrot.lane.b32.xlu0 %v499, 64
        %v506 = vpop.permute.xlu0 %505
        %v508 = vmul.f32 %v498, %v506
        %510 = vrot.lane.b32.xlu0 %v508, 32
        %v511 = vpop.permute.xlu0 %510
        %v513 = vadd.f32 %v503, %v511
        %v514 = vtanh.pop %v513
        %516 = vrot.lane.b32.xlu0 %v514, 64
        %v517 = vpop.permute.xlu0 %516
        %v519 = vmul.f32 %v498, %v517
        %521 = vrot.lane.b32.xlu0 %v519, 32
        %v522 = vpop.permute.xlu0 %521
        %vm524 = vcmask 256002
        %525 = vst.msk [vmem:[#allocation2] sm:$0x4] %vm524, %v522
        %v526 = vpack.c.bf16 %v519, %v519
        %v528 = vrot.slane %v526, 1
        %529 = vrot.lane.b32.xlu0 %v528, 32
        %v530 = vpop.permute.xlu0 %529
        %v532 = vsel %vm319, %v530, 0
        %534 = vmatpush.bf16.msra.mxu0 0
        %535 = vmatpush.bf16.msra.mxu0 0
        %536 = vmatpush.bf16.msra.mxu0 0
        %537 = vmatpush.bf16.msra.mxu0 0
        %538 = vmatpush.bf16.msra.mxu0 0
        %539 = vmatpush.bf16.msra.mxu0 0
        %540 = vmatpush.bf16.msra.mxu0 %v316
        %541 = vmatpush.bf16.msra.mxu0 %v315
        %542 = vmatmul.bf16.gmra.mxu0 %v532
        %v543 = vpop.f32.mrf.mxu0
        %v544 = vadd.f32 0.0, %v543
        %v545 = vpop.f32.mrf.mxu0
        %546 = vdwg.mxu0
        %v548 = vrot.slane %v544, 5
        %v550 = vadd.f32 %v303, %v548
        %v551 = vxor.u32 %v550, 2147483648
        %v552 = vmul.f32 %v551, 1.442695
        %v553 = vpow.pop %v552
        %v554 = vadd.f32 %v553, 1.0
        %v555 = vrcp.pop %v554
        %v556 = vmul.f32 %v554, %v555
        %v557 = vsub.f32 1.0, %v556
        %v558 = vmul.f32 %v555, %v557
        %v559 = vadd.f32 %v555, %v558
        %vm560 = vweird.f32 %v554
        %vm561 = vweird.f32 %v555
        %vm562 = vmor %vm560, %vm561
        %v563 = vsel %vm562, %v555, %v559
        %v564 = vand.u32 2147483647, %v554
        %vm565 = vcmp.eq.f32.partialorder %v564, 8.507059e+37
        %v566 = vand.u32 %v554, 2147483648
        %v567 = vor.u32 1.1754944e-38, %v566
        %v568 = vsel %vm565, %v567, %v563
        %v569 = vmul.f32 1.0, %v568
        %v570 = vtanh.pop %v550
        %v572 = vrot.slane %v513, 7
        %v574 = vmul.f32 %v569, %v572
        %576 = vrot.lane.b32.xlu0 %v570, 64
        %v577 = vpop.permute.xlu0 %576
        %v579 = vmul.f32 %v569, %v577
        %581 = vrot.lane.b32.xlu0 %v579, 32
        %v582 = vpop.permute.xlu0 %581
        %v584 = vadd.f32 %v574, %v582
        %v585 = vtanh.pop %v584
        %587 = vrot.lane.b32.xlu0 %v585, 64
        %v588 = vpop.permute.xlu0 %587
        %v590 = vmul.f32 %v569, %v588
        %592 = vrot.lane.b32.xlu0 %v590, 32
        %v593 = vpop.permute.xlu0 %592
        %vm595 = vcmask 257027
        %596 = vst.msk [vmem:[#allocation2] sm:$0x8] %vm595, %v593
        %v597 = vpack.c.bf16 %v590, %v590
        %v599 = vshrl.u32 %v597, 16
        %v601 = vrot.slane %v599, 1
        %602 = vrot.lane.b32.xlu0 %v601, 32
        %v603 = vpop.permute.xlu0 %602
        %v605 = vsel %vm319, %v603, 0
        %607 = vmatpush.bf16.msra.mxu0 0
        %608 = vmatpush.bf16.msra.mxu0 0
        %609 = vmatpush.bf16.msra.mxu0 0
        %610 = vmatpush.bf16.msra.mxu0 0
        %611 = vmatpush.bf16.msra.mxu0 0
        %612 = vmatpush.bf16.msra.mxu0 0
        %613 = vmatpush.bf16.msra.mxu0 %v316
        %614 = vmatpush.bf16.msra.mxu0 %v315
        %615 = vmatmul.bf16.gmra.mxu0 %v605
        %v616 = vpop.f32.mrf.mxu0
        %v617 = vadd.f32 0.0, %v616
        %v618 = vpop.f32.mrf.mxu0
        %619 = vdwg.mxu0
        %v621 = vrot.slane %v617, 4
        %v623 = vadd.f32 %v303, %v621
        %v624 = vxor.u32 %v623, 2147483648
        %v625 = vmul.f32 %v624, 1.442695
        %v626 = vpow.pop %v625
        %v627 = vadd.f32 %v626, 1.0
        %v628 = vrcp.pop %v627
        %v629 = vmul.f32 %v627, %v628
        %v630 = vsub.f32 1.0, %v629
        %v631 = vmul.f32 %v628, %v630
        %v632 = vadd.f32 %v628, %v631
        %vm633 = vweird.f32 %v627
        %vm634 = vweird.f32 %v628
        %vm635 = vmor %vm633, %vm634
        %v636 = vsel %vm635, %v628, %v632
        %v637 = vand.u32 2147483647, %v627
        %vm638 = vcmp.eq.f32.partialorder %v637, 8.507059e+37
        %v639 = vand.u32 %v627, 2147483648
        %v640 = vor.u32 1.1754944e-38, %v639
        %v641 = vsel %vm638, %v640, %v636
        %v642 = vmul.f32 1.0, %v641
        %v643 = vtanh.pop %v623
        %v645 = vrot.slane %v584, 7
        %v647 = vmul.f32 %v642, %v645
        %649 = vrot.lane.b32.xlu0 %v643, 64
        %v650 = vpop.permute.xlu0 %649
        %v652 = vmul.f32 %v642, %v650
        %654 = vrot.lane.b32.xlu0 %v652, 32
        %v655 = vpop.permute.xlu0 %654
        %v657 = vadd.f32 %v647, %v655
        %v658 = vtanh.pop %v657
        %660 = vrot.lane.b32.xlu0 %v658, 64
        %v661 = vpop.permute.xlu0 %660
        %v663 = vmul.f32 %v642, %v661
        %665 = vrot.lane.b32.xlu0 %v663, 32
        %v666 = vpop.permute.xlu0 %665
        %vm668 = vcmask 258052
        %669 = vst.msk [vmem:[#allocation2] sm:$0x10] %vm668, %v666
        %v670 = vpack.c.bf16 %v663, %v663
        %v672 = vrot.slane %v670, 2
        %673 = vrot.lane.b32.xlu0 %v672, 32
        %v674 = vpop.permute.xlu0 %673
        %v676 = vsel %vm319, %v674, 0
        %678 = vmatpush.bf16.msra.mxu0 0
        %679 = vmatpush.bf16.msra.mxu0 0
        %680 = vmatpush.bf16.msra.mxu0 0
        %681 = vmatpush.bf16.msra.mxu0 0
        %682 = vmatpush.bf16.msra.mxu0 0
        %683 = vmatpush.bf16.msra.mxu0 0
        %684 = vmatpush.bf16.msra.mxu0 %v316
        %685 = vmatpush.bf16.msra.mxu0 %v315
        %686 = vmatmul.bf16.gmra.mxu0 %v676
        %v687 = vpop.f32.mrf.mxu0
        %v688 = vadd.f32 0.0, %v687
        %v689 = vpop.f32.mrf.mxu0
        %690 = vdwg.mxu0
        %v692 = vrot.slane %v688, 3
        %v694 = vadd.f32 %v303, %v692
        %v695 = vxor.u32 %v694, 2147483648
        %v696 = vmul.f32 %v695, 1.442695
        %v697 = vpow.pop %v696
        %v698 = vadd.f32 %v697, 1.0
        %v699 = vrcp.pop %v698
        %v700 = vmul.f32 %v698, %v699
        %v701 = vsub.f32 1.0, %v700
        %v702 = vmul.f32 %v699, %v701
        %v703 = vadd.f32 %v699, %v702
        %vm704 = vweird.f32 %v698
        %vm705 = vweird.f32 %v699
        %vm706 = vmor %vm704, %vm705
        %v707 = vsel %vm706, %v699, %v703
        %v708 = vand.u32 2147483647, %v698
        %vm709 = vcmp.eq.f32.partialorder %v708, 8.507059e+37
        %v710 = vand.u32 %v698, 2147483648
        %v711 = vor.u32 1.1754944e-38, %v710
        %v712 = vsel %vm709, %v711, %v707
        %v713 = vmul.f32 1.0, %v712
        %v714 = vtanh.pop %v694
        %v716 = vrot.slane %v657, 7
        %v718 = vmul.f32 %v713, %v716
        %720 = vrot.lane.b32.xlu0 %v714, 64
        %v721 = vpop.permute.xlu0 %720
        %v723 = vmul.f32 %v713, %v721
        %725 = vrot.lane.b32.xlu0 %v723, 32
        %v726 = vpop.permute.xlu0 %725
        %v728 = vadd.f32 %v718, %v726
        %v729 = vtanh.pop %v728
        %731 = vrot.lane.b32.xlu0 %v729, 64
        %v732 = vpop.permute.xlu0 %731
        %v734 = vmul.f32 %v713, %v732
        %736 = vrot.lane.b32.xlu0 %v734, 32
        %v737 = vpop.permute.xlu0 %736
        %vm739 = vcmask 259077
        %740 = vst.msk [vmem:[#allocation2] sm:$0x20] %vm739, %v737
        %v741 = vpack.c.bf16 %v734, %v734
        %v743 = vshrl.u32 %v741, 16
        %v745 = vrot.slane %v743, 2
        %746 = vrot.lane.b32.xlu0 %v745, 32
        %v747 = vpop.permute.xlu0 %746
        %v749 = vsel %vm319, %v747, 0
        %751 = vmatpush.bf16.msra.mxu0 0
        %752 = vmatpush.bf16.msra.mxu0 0
        %753 = vmatpush.bf16.msra.mxu0 0
        %754 = vmatpush.bf16.msra.mxu0 0
        %755 = vmatpush.bf16.msra.mxu0 0
        %756 = vmatpush.bf16.msra.mxu0 0
        %757 = vmatpush.bf16.msra.mxu0 %v316
        %758 = vmatpush.bf16.msra.mxu0 %v315
        %759 = vmatmul.bf16.gmra.mxu0 %v749
        %v760 = vpop.f32.mrf.mxu0
        %v761 = vadd.f32 0.0, %v760
        %v762 = vpop.f32.mrf.mxu0
        %763 = vdwg.mxu0
        %v765 = vrot.slane %v761, 2
        %v767 = vadd.f32 %v303, %v765
        %v768 = vxor.u32 %v767, 2147483648
        %v769 = vmul.f32 %v768, 1.442695
        %v770 = vpow.pop %v769
        %v771 = vadd.f32 %v770, 1.0
        %v772 = vrcp.pop %v771
        %v773 = vmul.f32 %v771, %v772
        %v774 = vsub.f32 1.0, %v773
        %v775 = vmul.f32 %v772, %v774
        %v776 = vadd.f32 %v772, %v775
        %vm777 = vweird.f32 %v771
        %vm778 = vweird.f32 %v772
        %vm779 = vmor %vm777, %vm778
        %v780 = vsel %vm779, %v772, %v776
        %v781 = vand.u32 2147483647, %v771
        %vm782 = vcmp.eq.f32.partialorder %v781, 8.507059e+37
        %v783 = vand.u32 %v771, 2147483648
        %v784 = vor.u32 1.1754944e-38, %v783
        %v785 = vsel %vm782, %v784, %v780
        %v786 = vmul.f32 1.0, %v785
        %v787 = vtanh.pop %v767
        %v789 = vrot.slane %v728, 7
        %v791 = vmul.f32 %v786, %v789
        %793 = vrot.lane.b32.xlu0 %v787, 64
        %v794 = vpop.permute.xlu0 %793
        %v796 = vmul.f32 %v786, %v794
        %798 = vrot.lane.b32.xlu0 %v796, 32
        %v799 = vpop.permute.xlu0 %798
        %v801 = vadd.f32 %v791, %v799
        %v802 = vtanh.pop %v801
        %804 = vrot.lane.b32.xlu0 %v802, 64
        %v805 = vpop.permute.xlu0 %804
        %v807 = vmul.f32 %v786, %v805
        %809 = vrot.lane.b32.xlu0 %v807, 32
        %v810 = vpop.permute.xlu0 %809
        %vm812 = vcmask 260102
        %813 = vst.msk [vmem:[#allocation2] sm:$0x40] %vm812, %v810
        %v814 = vpack.c.bf16 %v807, %v807
        %v816 = vrot.slane %v814, 3
        %817 = vrot.lane.b32.xlu0 %v816, 32
        %v818 = vpop.permute.xlu0 %817
        %v820 = vsel %vm319, %v818, 0
        %822 = vmatpush.bf16.msra.mxu0 0
        %823 = vmatpush.bf16.msra.mxu0 0
        %824 = vmatpush.bf16.msra.mxu0 0
        %825 = vmatpush.bf16.msra.mxu0 0
        %826 = vmatpush.bf16.msra.mxu0 0
        %827 = vmatpush.bf16.msra.mxu0 0
        %828 = vmatpush.bf16.msra.mxu0 %v316
        %829 = vmatpush.bf16.msra.mxu0 %v315
        %830 = vmatmul.bf16.gmra.mxu0 %v820
        %v831 = vpop.f32.mrf.mxu0
        %v832 = vadd.f32 0.0, %v831
        %v833 = vpop.f32.mrf.mxu0
        %834 = vdwg.mxu0
        %v836 = vrot.slane %v832, 1
        %v838 = vadd.f32 %v303, %v836
        %v839 = vxor.u32 %v838, 2147483648
        %v840 = vmul.f32 %v839, 1.442695
        %v841 = vpow.pop %v840
        %v842 = vadd.f32 %v841, 1.0
        %v843 = vrcp.pop %v842
        %v844 = vmul.f32 %v842, %v843
        %v845 = vsub.f32 1.0, %v844
        %v846 = vmul.f32 %v843, %v845
        %v847 = vadd.f32 %v843, %v846
        %vm848 = vweird.f32 %v842
        %vm849 = vweird.f32 %v843
        %vm850 = vmor %vm848, %vm849
        %v851 = vsel %vm850, %v843, %v847
        %v852 = vand.u32 2147483647, %v842
        %vm853 = vcmp.eq.f32.partialorder %v852, 8.507059e+37
        %v854 = vand.u32 %v842, 2147483648
        %v855 = vor.u32 1.1754944e-38, %v854
        %v856 = vsel %vm853, %v855, %v851
        %v857 = vmul.f32 1.0, %v856
        %v858 = vtanh.pop %v838
        %v860 = vrot.slane %v801, 7
        %v862 = vmul.f32 %v857, %v860
        %864 = vrot.lane.b32.xlu0 %v858, 64
        %v865 = vpop.permute.xlu0 %864
        %v867 = vmul.f32 %v857, %v865
        %869 = vrot.lane.b32.xlu0 %v867, 32
        %v870 = vpop.permute.xlu0 %869
        %v872 = vadd.f32 %v862, %v870
        %v873 = vtanh.pop %v872
        %875 = vrot.lane.b32.xlu0 %v873, 64
        %v876 = vpop.permute.xlu0 %875
        %v878 = vmul.f32 %v857, %v876
        %880 = vrot.lane.b32.xlu0 %v878, 32
        %v881 = vpop.permute.xlu0 %880
        %vm883 = vcmask 261127
        %884 = vst.msk [vmem:[#allocation2] sm:$0x80] %vm883, %v881
        %v885 = vld [vmem:[%s4] sm:$0xff]
        %v886 = vld [vmem:[%s4 + $0x8] sm:$0xff]
        %v887 = vld [vmem:[%s4 + $0x10] sm:$0xff]
        %v888 = vld [vmem:[%s4 + $0x18] sm:$0xff]
        %v889 = vld [vmem:[%s4 + $0x20] sm:$0x1]
        %v890 = vld [vmem:[#allocation2] sm:$0xff]
        %v891 = vperm.slane %v889, 0
        %v893 = vsel %vm319, %v890, 0
        %895 = vmatpush.msra.mxu0 0.0
        %896 = vmatpush.msra.mxu0 0.0
        %897 = vmatpush.msra.mxu0 0.0
        %898 = vmatpush.msra.mxu0 0.0
        %899 = vmatpush.msra.mxu0 0.0
        %900 = vmatpush.msra.mxu0 0.0
        %901 = vmatpush.msra.mxu0 0.0
        %902 = vmatpush.msra.mxu0 0.0
        %903 = vmatpush.msra.mxu0 0.0
        %904 = vmatpush.msra.mxu0 0.0
        %905 = vmatpush.msra.mxu0 0.0
        %906 = vmatpush.msra.mxu0 0.0
        %907 = vmatpush.msra.mxu0 %v888
        %908 = vmatpush.msra.mxu0 %v887
        %909 = vmatpush.msra.mxu0 %v886
        %910 = vmatpush.msra.mxu0 %v885
        %911 = vmatmul.f32.gmra.mxu0 %v893
        %v912 = vpop.f32.mrf.mxu0
        %v913 = vadd.f32 %v891, %v912
        %914 = vdwg.mxu0
        %vm915 = vcmask 64512
        %v916 = vsel %vm915, %v913, -inf
        %917 = vmax.xlane.f32.xlu0 %v916
        %v918 = vpop.xlane.xlu0 %917
        %v919 = vsub.f32 %v913, %v918
        %v920 = vmul.f32 %v919, 1.442695
        %v921 = vpow.pop %v920
        %v922 = vsel %vm915, %v921, 0.0
        %923 = vadd.xlane.f32.xlu0 %v922
        %v924 = vpop.xlane.xlu0 %923
        %v925 = vrcp.pop %v924
        %v926 = vmul.f32 %v921, %v925
        %927 = vst.msk [vmem:[%s254] sm:$0xff] %vm915, %v926
        %v928 = vld [vmem:[%s4 + $0x28] sm:$0xff]
        %v929 = vld [vmem:[%s4 + $0x30] sm:$0xff]
        %v930 = vld [vmem:[%s4 + $0x38] sm:$0xff]
        %v931 = vld [vmem:[%s4 + $0x40] sm:$0xff]
        %v932 = vld [vmem:[%s4 + $0x48] sm:$0xff]
        %v933 = vld [vmem:[%s4 + $0x50] sm:$0xff]
        %v934 = vld [vmem:[%s4 + $0x58] sm:$0xff]
        %v935 = vld [vmem:[%s4 + $0x60] sm:$0xff]
        %v936 = vld [vmem:[%s4 + $0x68] sm:$0xff]
        %v937 = vld [vmem:[%s4 + $0x70] sm:$0xff]
        %v938 = vld [vmem:[%s4 + $0x78] sm:$0xff]
        %v939 = vld [vmem:[%s4 + $0x80] sm:$0xff]
        %v940 = vld [vmem:[%s4 + $0x88] sm:$0xff]
        %v941 = vld [vmem:[%s4 + $0x90] sm:$0xff]
        %v942 = vld [vmem:[%s4 + $0x98] sm:$0xff]
        %v943 = vld [vmem:[%s4 + $0xa0] sm:$0xff]
        %v944 = vld [vmem:[%s4 + $0xa8] sm:$0x1]
        %v945 = vld [vmem:[%s4 + $0xb0] sm:$0xff]
        %v946 = vld [vmem:[%s4 + $0xb8] sm:$0xff]
        %v947 = vld [vmem:[%s4 + $0xc0] sm:$0xff]
        %v948 = vld [vmem:[%s4 + $0xc8] sm:$0xff]
        %v949 = vld [vmem:[%s4 + $0xd0] sm:$0x1]
        %v950 = vld [vmem:[%s266] sm:$0x1]
        %951 = vmatpush.msra.mxu0 %v943
        %952 = vmatpush.msra.mxu0 %v942
        %953 = vmatpush.msra.mxu0 %v941
        %954 = vmatpush.msra.mxu0 %v940
        %955 = vmatpush.msra.mxu0 %v939
        %956 = vmatpush.msra.mxu0 %v938
        %957 = vmatpush.msra.mxu0 %v937
        %958 = vmatpush.msra.mxu0 %v936
        %959 = vmatpush.msra.mxu0 %v935
        %960 = vmatpush.msra.mxu0 %v934
        %961 = vmatpush.msra.mxu0 %v933
        %962 = vmatpush.msra.mxu0 %v932
        %963 = vmatpush.msra.mxu0 %v931
        %964 = vmatpush.msra.mxu0 %v930
        %965 = vmatpush.msra.mxu0 %v929
        %966 = vmatpush.msra.mxu0 %v928
        %967 = vmatmul.f32.gmra.mxu0 %v950
        %v968 = vpop.f32.mrf.mxu0
        %v969 = vadd.f32 %v944, %v968
        %970 = vdwg.mxu0
        %v971 = vmax.f32 %v969, 0.0
        %v973 = vsel %vm319, %v971, 0
        %975 = vmatpush.msra.mxu0 0.0
        %976 = vmatpush.msra.mxu0 0.0
        %977 = vmatpush.msra.mxu0 0.0
        %978 = vmatpush.msra.mxu0 0.0
        %979 = vmatpush.msra.mxu0 0.0
        %980 = vmatpush.msra.mxu0 0.0
        %981 = vmatpush.msra.mxu0 0.0
        %982 = vmatpush.msra.mxu0 0.0
        %983 = vmatpush.msra.mxu0 0.0
        %984 = vmatpush.msra.mxu0 0.0
        %985 = vmatpush.msra.mxu0 0.0
        %986 = vmatpush.msra.mxu0 0.0
        %987 = vmatpush.msra.mxu0 %v948
        %988 = vmatpush.msra.mxu0 %v947
        %989 = vmatpush.msra.mxu0 %v946
        %990 = vmatpush.msra.mxu0 %v945
        %991 = vmatmul.f32.gmra.mxu0 %v973
        %v992 = vpop.f32.mrf.mxu0
        %v993 = vadd.f32 %v949, %v992
        %994 = vdwg.mxu0
        %vm995 = vcmask 0
        %996 = vst.msk [vmem:[%s269] sm:$0x1] %vm995, %v993
        %s997 = sand.u32 %s144, 1
        %s998 = scalar_lea.sflag [#allocation4], %s997
        %s999 = sand.u32 %s144, 1
        %s1000 = smul.addr %s999, 8
        %s1001 = scalar_lea.vmem [#allocation3], %s1000
        %p1002 = scmp.lt.s32.totalorder %s21, 1
        %s1003 = scalar_select %p1002, %s21, 1
        %s1004 = scalar_lea.vmem %s6, %s1003
        // Predicated region
        $region41: #{da_value_network_batched.1} parent=39 // pred_check
          %p1005 = pneg %p154
        $region42: #{da_value_network_batched.1} parent=39 // pred_check_branch
          %1007 = sbr.rel (%p1005) target = $region44
        $region43: #{da_value_network_batched.1} parent=39 // pred_region
          %1009 = vsyncadd %s998, 0
          %s1010 = smul.addr %s21, 8
          %s1011 = scalar_lea.hbm %s5, %s1010
          %s1013 = sshll.u32 %s1001, 4
          %s1014 = int_to_ptr.vmem [resolvable:$true] %s1013
          %s1015 = sshll.u32 %s1011, 4
          %s1016 = int_to_ptr.hbm [resolvable:$true] %s1015
          %1018 = dma.vmem_to_hbm [thread:$0]  %s1014, 128, %s1016, %s998
        $region44: #{da_value_network_batched.1} parent=39 // pred_fallthru
          _
        // Predicated region
        $region45: #{da_value_network_batched.1} parent=39 // pred_check
          %p1019 = pneg %p180
        $region46: #{da_value_network_batched.1} parent=39 // pred_check_branch
          %1021 = sbr.rel (%p1019) target = $region48
        $region47: #{da_value_network_batched.1} parent=39 // pred_region
          _
        $region48: #{da_value_network_batched.1} parent=39 // pred_fallthru
          _
      $region40: #{da_value_network_batched.1} parent=5 // pred_fallthru
        _
      %p1022 = scmp.le.s32.totalorder 2, %s16
      // Predicated region
      $region49: #{da_value_network_batched.1} parent=5 // pred_check
        %p1023 = pneg %p1022
      $region50: #{da_value_network_batched.1} parent=5 // pred_check_branch
        %1025 = sbr.rel (%p1023) target = $region52
      $region51: #{da_value_network_batched.1} parent=5 // pred_region
        %s1026 = ssub.s32 %s16, 2
        // Predicated region
        $region53: #{da_value_network_batched.1} parent=51 // pred_check
          %p1027 = pneg %p160
        $region54: #{da_value_network_batched.1} parent=51 // pred_check_branch
          %1029 = sbr.rel (%p1027) target = $region56
        $region55: #{da_value_network_batched.1} parent=51 // pred_region
          %s1030 = sand.u32 %s145, 1
          %s1031 = scalar_lea.sflag [#allocation4], %s1030
          %s1032 = sand.u32 %s145, 1
          %s1033 = smul.addr %s1032, 8
          %s1034 = scalar_lea.vmem [#allocation3], %s1033
          %1036 = dma.done %s1031, 128
        $region56: #{da_value_network_batched.1} parent=51 // pred_fallthru
          _
        // Predicated region
        $region57: #{da_value_network_batched.1} parent=51 // pred_check
          %p1037 = pneg %p186
        $region58: #{da_value_network_batched.1} parent=51 // pred_check_branch
          %1039 = sbr.rel (%p1037) target = $region60
        $region59: #{da_value_network_batched.1} parent=51 // pred_region
          %p1040 = scmp.lt.s32.totalorder %s22, 1
          %s1041 = scalar_select %p1040, %s22, 1
          %s1042 = scalar_lea.vmem %s6, %s1041
        $region60: #{da_value_network_batched.1} parent=51 // pred_fallthru
          _
      $region52: #{da_value_network_batched.1} parent=5 // pred_fallthru
        _
    $region6: #{da_value_network_batched.1} parent=1 // loop_footer
      %s20 = sadd.s32 1, %s16
    $region7: #{da_value_network_batched.1} parent=1 // loop_footer_branch
      %15 = sbr.rel target = $region3
    $region8: #{da_value_network_batched.1} parent=1 // loop_exit
      _
    %1043 = vsyncpa [#allocation4], 1
    %s1044 = scalar_lea.sflag [#allocation4], 1
    %1045 = vsyncpa %s1044, 1

</llo_original>
